<compile_context>
chip_gen: v5e
topology: v5e:2x2
jax: 0.10.0
libtpu: 0.0.40
codegen_flags: <defaults>
</compile_context>

<pallas_src>
import functools

import jax
import jax.numpy as jnp
from jax.experimental import pallas as pl
from jax.experimental.pallas import tpu as pltpu

BN_EPS = 1e-5
CIN_PAD = 8      # pad the tiny first-layer Cin once to a sublane-friendly width
LANE = 128       # lane-dense channel width for streamed activations / outputs


def _round_up(x, m):
    return -(-x // m) * m


# ---------------------------------------------------------------------------
# Kernel bodies
# ---------------------------------------------------------------------------

def _point_stack_kernel(x_ref, *refs, num_layers, tap_layer, n_valid, n_pad,
                        tm, dim_k, chunk):
    """Fused point MLP stack (h1+h2) + in-kernel symfn_max for one row tile.

    refs = (w0, b0, ..., w_{L-1}, b_{L-1}, tap_ref, gmax_ref)
      x_ref   : [1, tm, CIN_PAD]   bf16 rows of one cloud
      w_l     : [Cin_l, Cout_l]    bf16 BN-folded weights (VMEM-resident)
      b_l     : [1, Cout_l]        f32 BN-folded biases (VMEM-resident)
      tap_ref : [1, tm, 128]       bf16 per-point h1 features (lane-dense)
      gmax_ref: [1, 1, dim_k]      f32 running per-cloud max (accumulator)
    """
    param_refs = refs[:-2]
    tap_ref = refs[-2]
    gmax_ref = refs[-1]
    t = pl.program_id(1)

    @pl.when(t == 0)
    def _():
        # Post-ReLU features are >= 0, so 0 is a valid identity for the max.
        gmax_ref[...] = jnp.zeros_like(gmax_ref)

    h = x_ref[0]                                            # [tm, Cin] bf16
    for l in range(num_layers - 1):
        w = param_refs[2 * l][...]
        b = param_refs[2 * l + 1][...]
        h = jnp.dot(h, w, preferred_element_type=jnp.float32) + b
        h = jnp.maximum(h, 0.0).astype(jnp.bfloat16)
        if l == tap_layer:
            tap_ref[0] = h                                  # lane-dense bf16 store

    # Last (widest) layer: compute in `chunk`-lane column blocks and reduce each
    # block straight into the per-cloud max, so the full [tm, dim_k] activation
    # never lives in vregs and is never written to HBM.
    w_last = param_refs[2 * (num_layers - 1)]
    b_last = param_refs[2 * (num_layers - 1) + 1]
    if n_pad != n_valid:
        row_ids = jax.lax.broadcasted_iota(jnp.int32, (tm, 1), 0) + t * tm
        valid = row_ids < n_valid
    else:
        valid = None
    part_max = []
    for j in range(0, dim_k, chunk):
        c = jnp.dot(h, w_last[:, j:j + chunk],
                    preferred_element_type=jnp.float32) + b_last[:, j:j + chunk]
        c = jnp.maximum(c, 0.0)
        if valid is not None:
            c = jnp.where(valid, c, 0.0)    # padded rows can never win the max
        part_max.append(jnp.max(c, axis=0, keepdims=True))
    tile_max = jnp.concatenate(part_max, axis=-1)           # [1, dim_k]
    gmax_ref[...] = jnp.maximum(gmax_ref[...], tile_max[None])


def _regressor_kernel(l0_ref, g_ref, wl_ref, w1_ref, b1_ref, w2_ref, b2_ref,
                      o_ref):
    """Fused per-point regressor (1088 -> 256 -> 64 -> out) for one row tile.

    The 1088-wide first layer is split: the global-feature half
    (g0 @ W_global + b0) is precomputed per cloud and arrives as g_ref
    [1, 1, 256]; only the local 128-lane half is multiplied here, so the
    [M, 1088] concat slab never exists.
    """
    h = jnp.dot(l0_ref[0], wl_ref[...], preferred_element_type=jnp.float32)
    h = jnp.maximum(h + g_ref[0], 0.0)
    h = jnp.dot(h.astype(jnp.bfloat16), w1_ref[...],
                preferred_element_type=jnp.float32) + b1_ref[...]
    h = jnp.maximum(h, 0.0)
    h = jnp.dot(h.astype(jnp.bfloat16), w2_ref[...],
                preferred_element_type=jnp.float32) + b2_ref[...]
    o_ref[0] = h


# ---------------------------------------------------------------------------
# pallas_call wrappers
# ---------------------------------------------------------------------------

def point_stack_pallas(rows, params, *, tap_layer, tap_dim, dim_k, n_valid, tm,
                       chunk, vmem_limit_bytes):
    """rows: [2B, N_pad, CIN_PAD] bf16.  Returns (l0 [2B,N_pad,128] bf16,
    g0 [2B,dim_k] f32 per-cloud max of the final ReLU features)."""
    nclouds, n_pad, cin = rows.shape
    n_tiles = n_pad // tm

    in_specs = [pl.BlockSpec((1, tm, cin), lambda c, t: (c, t, 0))]
    flat = []
    for (w, b) in params:
        flat += [w, b]
        in_specs.append(pl.BlockSpec(w.shape, lambda c, t: (0, 0)))  # resident
        in_specs.append(pl.BlockSpec(b.shape, lambda c, t: (0, 0)))  # resident

    out_shapes = (
        jax.ShapeDtypeStruct((nclouds, n_pad, tap_dim), jnp.bfloat16),  # l0 tap
        jax.ShapeDtypeStruct((nclouds, 1, dim_k), jnp.float32),         # symfn_max
    )
    out_specs = (
        pl.BlockSpec((1, tm, tap_dim), lambda c, t: (c, t, 0)),
        pl.BlockSpec((1, 1, dim_k), lambda c, t: (c, 0, 0)),   # accumulator
    )
    kernel = functools.partial(
        _point_stack_kernel, num_layers=len(params), tap_layer=tap_layer,
        n_valid=n_valid, n_pad=n_pad, tm=tm, dim_k=dim_k, chunk=chunk)

    l0, gmax = pl.pallas_call(
        kernel,
        out_shape=out_shapes,
        grid_spec=pltpu.PrefetchScalarGridSpec(
            num_scalar_prefetch=0,
            grid=(nclouds, n_tiles),
            in_specs=in_specs,
            out_specs=out_specs),
        compiler_params=pltpu.CompilerParams(
            dimension_semantics=("parallel", "arbitrary"),
            vmem_limit_bytes=vmem_limit_bytes),
    )(rows, *flat)
    return l0, gmax[:, 0, :]


def regressor_pallas(l0, g_term, w_local, l1, l2, *, tm, out_pad,
                     vmem_limit_bytes):
    """l0: [2B, N_pad, 128] bf16; g_term: [2B, 256] f32 per-cloud global term."""
    nclouds, n_pad, cl = l0.shape
    n_tiles = n_pad // tm
    w1, b1 = l1
    w2, b2 = l2
    g3 = g_term[:, None, :].astype(jnp.float32)              # [2B, 1, 256]

    in_specs = [
        pl.BlockSpec((1, tm, cl), lambda c, t: (c, t, 0)),            # l0 rows
        pl.BlockSpec((1, 1, g3.shape[-1]), lambda c, t: (c, 0, 0)),   # per-cloud
        pl.BlockSpec(w_local.shape, lambda c, t: (0, 0)),             # resident
        pl.BlockSpec(w1.shape, lambda c, t: (0, 0)),
        pl.BlockSpec(b1.shape, lambda c, t: (0, 0)),
        pl.BlockSpec(w2.shape, lambda c, t: (0, 0)),
        pl.BlockSpec(b2.shape, lambda c, t: (0, 0)),
    ]
    return pl.pallas_call(
        _regressor_kernel,
        out_shape=jax.ShapeDtypeStruct((nclouds, n_pad, out_pad), jnp.float32),
        grid_spec=pltpu.PrefetchScalarGridSpec(
            num_scalar_prefetch=0,
            grid=(nclouds, n_tiles),
            in_specs=in_specs,
            out_specs=pl.BlockSpec((1, tm, out_pad), lambda c, t: (c, t, 0))),
        compiler_params=pltpu.CompilerParams(
            dimension_semantics=("parallel", "parallel"),
            vmem_limit_bytes=vmem_limit_bytes),
    )(l0, g3, w_local, w1, b1, w2, b2)


# ---------------------------------------------------------------------------
# Parameter construction (deterministic, PyTorch-default-like init) + BN folding
# ---------------------------------------------------------------------------

def _linear_params(key, cin, cout):
    kw, kb = jax.random.split(key)
    bound = 1.0 / (cin ** 0.5)
    w = jax.random.uniform(kw, (cin, cout), jnp.float32, -bound, bound)
    b = jax.random.uniform(kb, (cout,), jnp.float32, -bound, bound)
    return w, b


def _bn_params(key, c):
    kg, kb, km, kv = jax.random.split(key, 4)
    gamma = 1.0 + 0.1 * jax.random.normal(kg, (c,), jnp.float32)
    beta = 0.1 * jax.random.normal(kb, (c,), jnp.float32)
    mean = 0.1 * jax.random.normal(km, (c,), jnp.float32)
    var = 1.0 + 0.1 * jax.random.uniform(kv, (c,), jnp.float32)
    return gamma, beta, mean, var


def _folded_bn_layer(key, cin, cout):
    """Conv1d(k=1)/Linear followed by eval-mode BatchNorm1d, folded into (w, b)."""
    k1, k2 = jax.random.split(key)
    w, b = _linear_params(k1, cin, cout)
    gamma, beta, mean, var = _bn_params(k2, cout)
    scale = gamma * jax.lax.rsqrt(var + BN_EPS)
    return w * scale[None, :], (b - mean) * scale + beta


class PlaneNetPallas:
    """JAX/Pallas port of PlaneNet.forward (eval mode, bf16 matmuls)."""

    def __init__(self, input_chal=3, num_s=21, output_chal=7, dim_k=1024,
                 use_tnet=False, scale=1, key=None, tm_max=1024,
                 vmem_limit_bytes=48 * 1024 * 1024):
        del output_chal, use_tnet  # unused in the torch forward as well
        key = jax.random.PRNGKey(0) if key is None else key
        self.input_chal = input_chal
        self.num_s = num_s
        self.tm_max = tm_max
        self.vmem_limit_bytes = vmem_limit_bytes

        mlp_h1 = [int(64 / scale), int(64 / scale)]
        mlp_h2 = [int(64 / scale), int(128 / scale), int(dim_k / scale)]
        widths = mlp_h1 + mlp_h2

        self.cin_pad = _round_up(input_chal, CIN_PAD)
        self.tap_layer = len(mlp_h1) - 1                 # h1 output (local feature)
        tap_true = mlp_h1[-1]
        self.tap_dim = _round_up(tap_true, LANE)         # lane-dense tap width
        self.dim_k = widths[-1]
        self.chunk = (256 if self.dim_k % 256 == 0 else
                      (128 if self.dim_k % 128 == 0 else self.dim_k))

        # --- shared point stack: Conv1d(k=1)+BN+ReLU x 5, BN folded, bf16 -----
        point_params = []
        last = input_chal
        for i, cout in enumerate(widths):
            key, sub = jax.random.split(key)
            w, b = _folded_bn_layer(sub, last, cout)
            if i == 0:                                     # pad tiny Cin (3 -> 8)
                w = jnp.pad(w, ((0, self.cin_pad - last), (0, 0)))
            if i == self.tap_layer:                        # lane-dense tap (64->128)
                w = jnp.pad(w, ((0, 0), (0, self.tap_dim - cout)))
                b = jnp.pad(b, (0, self.tap_dim - cout))
            if i == self.tap_layer + 1:                    # consume padded tap
                w = jnp.pad(w, ((0, self.tap_dim - last), (0, 0)))
            point_params.append((w.astype(jnp.bfloat16),
                                 b.reshape(1, -1).astype(jnp.float32)))
            last = cout
        self.point_params = point_params

        # --- regressor_s: Linear+BN+ReLU (1088->256), (256->64), Linear(64->59)
        in0 = tap_true + self.dim_k                        # 1088 channels
        key, sub = jax.random.split(key)
        w0, b0 = _folded_bn_layer(sub, in0, 256)
        w_local = jnp.pad(w0[:tap_true], ((0, self.tap_dim - tap_true), (0, 0)))
        self.reg_w_local = w_local.astype(jnp.bfloat16)            # [128, 256]
        self.reg_w_global = w0[tap_true:].astype(jnp.bfloat16)     # [1024, 256]
        self.reg_g_bias = b0.astype(jnp.float32)                   # [256]

        key, sub = jax.random.split(key)
        w1, b1 = _folded_bn_layer(sub, 256, 64)
        self.reg_l1 = (w1.astype(jnp.bfloat16),
                       b1.reshape(1, -1).astype(jnp.float32))

        self.out_dim = num_s + 3 + 3 + 32                  # 59
        self.out_pad = _round_up(self.out_dim, LANE)       # lane-dense output slab
        key, sub = jax.random.split(key)
        w2, b2 = _linear_params(sub, 64, self.out_dim)
        w2 = jnp.pad(w2, ((0, 0), (0, self.out_pad - self.out_dim)))
        b2 = jnp.pad(b2, (0, self.out_pad - self.out_dim))
        self.reg_l2 = (w2.astype(jnp.bfloat16),
                       b2.reshape(1, -1).astype(jnp.float32))

    # -- pure-jnp references mirroring the kernel math (same bf16 rounding) ----
    def _point_ref(self, rows, n_valid):
        h = rows
        l0 = None
        for i, (w, b) in enumerate(self.point_params[:-1]):
            h = jnp.dot(h, w, preferred_element_type=jnp.float32) + b
            h = jnp.maximum(h, 0.0).astype(jnp.bfloat16)
            if i == self.tap_layer:
                l0 = h
        w, b = self.point_params[-1]
        h = jnp.dot(h, w, preferred_element_type=jnp.float32) + b
        h = jnp.maximum(h, 0.0)
        g0 = jnp.max(h[:, :n_valid, :], axis=1)            # symfn_max
        return l0, g0

    def _reg_ref(self, l0, g_term):
        w1, b1 = self.reg_l1
        w2, b2 = self.reg_l2
        h = jnp.dot(l0, self.reg_w_local, preferred_element_type=jnp.float32)
        h = jnp.maximum(h + g_term[:, None, :], 0.0)
        h = jnp.dot(h.astype(jnp.bfloat16), w1,
                    preferred_element_type=jnp.float32) + b1
        h = jnp.maximum(h, 0.0)
        h = jnp.dot(h.astype(jnp.bfloat16), w2,
                    preferred_element_type=jnp.float32) + b2
        return h

    # -- forward ---------------------------------------------------------------
    def _forward(self, x, use_pallas):
        B, two, C, N = x.shape
        assert two == 2 and C == self.input_chal
        tm = min(self.tm_max, _round_up(N, 8))
        n_pad = _round_up(N, tm)

        # cat((x[:,0], x[:,1])) over the pair; channels-last rows per cloud
        x_cat = jnp.concatenate([x[:, 0], x[:, 1]], axis=0)        # [2B, C, N]
        rows = jnp.transpose(x_cat, (0, 2, 1))                     # [2B, N, C]
        rows = jnp.pad(rows, ((0, 0), (0, n_pad - N), (0, self.cin_pad - C)))
        rows = rows.astype(jnp.bfloat16)

        if use_pallas:
            l0, g0 = point_stack_pallas(
                rows, self.point_params, tap_layer=self.tap_layer,
                tap_dim=self.tap_dim, dim_k=self.dim_k, n_valid=N, tm=tm,
                chunk=self.chunk, vmem_limit_bytes=self.vmem_limit_bytes)
        else:
            l0, g0 = self._point_ref(rows, N)

        # global-feature half of regressor layer 0: tiny [2B, 256] term
        g_term = jnp.dot(g0.astype(jnp.bfloat16), self.reg_w_global,
                         preferred_element_type=jnp.float32) + self.reg_g_bias

        if use_pallas:
            pred = regressor_pallas(
                l0, g_term, self.reg_w_local, self.reg_l1, self.reg_l2,
                tm=tm, out_pad=self.out_pad,
                vmem_limit_bytes=self.vmem_limit_bytes)
        else:
            pred = self._reg_ref(l0, g_term)

        pred = pred[:, :N, :self.out_dim]                          # [2B, N, 59]
        pred_s, pred_t = pred[:B], pred[B:]
        ns = self.num_s

        def split_heads(p):
            sem = p[..., :ns]
            center = p[..., ns:ns + 3]
            norm = p[..., ns + 3:ns + 6]
            norm = norm / (jnp.linalg.norm(norm, axis=-1, keepdims=True) + 1e-16)
            feat = p[..., ns + 6:]
            return sem, center, norm, feat

        sem_s, c_s, n_s, f_s = split_heads(pred_s)
        sem_t, c_t, n_t, f_t = split_heads(pred_t)
        to_cf = lambda a: jnp.transpose(a, (0, 2, 1))   # [b, N, C] -> [b, C, N]

        pred_semantic = jnp.stack([to_cf(sem_s), to_cf(sem_t)], axis=1)  # [b,2,num_s,N]
        plane_feat = jnp.stack([to_cf(f_s), to_cf(f_t)], axis=1)         # [b,2,32,N]
        plane_pred_n = jnp.stack([n_s, n_t], axis=1)                     # [b,2,N,3]
        plane_pred_c = jnp.stack([c_s, c_t], axis=1)                     # [b,2,N,3]
        return pred_semantic, plane_feat, plane_pred_n, plane_pred_c

    def __call__(self, x):
        return self._forward(x, use_pallas=True)

    def reference(self, x):
        return self._forward(x, use_pallas=False)


if __name__ == "__main__":
    key = jax.random.PRNGKey(0)
    k_in, k_param = jax.random.split(key)

    B, C, N = 2, 3, 16
    num_s = 21
    x = jax.random.normal(k_in, (B, 2, C, N), jnp.float32)

    model = PlaneNetPallas(input_chal=C, num_s=num_s, dim_k=1024, key=k_param)

    outs = jax.block_until_ready(model(x))
    pred_semantic, plane_feat, plane_pred_n, plane_pred_c = outs

    assert pred_semantic.shape == (B, 2, num_s, N), pred_semantic.shape
    assert plane_feat.shape == (B, 2, 32, N), plane_feat.shape
    assert plane_pred_n.shape == (B, 2, N, 3), plane_pred_n.shape
    assert plane_pred_c.shape == (B, 2, N, 3), plane_pred_c.shape
    for o in outs:
        assert jnp.all(jnp.isfinite(o))
    norms = jnp.linalg.norm(plane_pred_n, axis=-1)
    assert jnp.allclose(norms, 1.0, atol=1e-3), norms

    # correctness vs a pure-jnp reference that uses the identical folded bf16
    # parameters (residual differences are only f32 accumulation order)
    ref_outs = jax.block_until_ready(model.reference(x))
    for o, r in zip(outs, ref_outs):
        assert jnp.allclose(o, r, rtol=5e-3, atol=5e-3), float(jnp.max(jnp.abs(o - r)))

    print("KERNEL_OK")
</pallas_src>

<mosaic_0001>
module attributes {stable_mosaic.version = 11 : i64} {
  func.func @_point_stack_kernel(%arg0: i32, %arg1: i32, %arg2: memref<1x16x8xbf16, #tpu.memory_space<vmem>>, %arg3: memref<8x64xbf16, #tpu.memory_space<vmem>>, %arg4: memref<1x64xf32, #tpu.memory_space<vmem>>, %arg5: memref<64x128xbf16, #tpu.memory_space<vmem>>, %arg6: memref<1x128xf32, #tpu.memory_space<vmem>>, %arg7: memref<128x64xbf16, #tpu.memory_space<vmem>>, %arg8: memref<1x64xf32, #tpu.memory_space<vmem>>, %arg9: memref<64x128xbf16, #tpu.memory_space<vmem>>, %arg10: memref<1x128xf32, #tpu.memory_space<vmem>>, %arg11: memref<128x1024xbf16, #tpu.memory_space<vmem>>, %arg12: memref<1x1024xf32, #tpu.memory_space<vmem>>, %arg13: memref<1x16x128xbf16, #tpu.memory_space<vmem>>, %arg14: memref<1x1x1024xf32, #tpu.memory_space<vmem>>) attributes {dimension_semantics = [#tpu.dimension_semantics<parallel>, #tpu.dimension_semantics<arbitrary>], iteration_bounds = array<i64: 4, 1>, scalar_prefetch = 0 : i64, scratch_operands = 0 : i64, tpu.core_type = #tpu.core_type<tc>, window_params = [{transform_indices = @transform_0, window_bounds = array<i64: 1, 16, 8>}, {pipeline_mode = #tpu.pipeline_mode<synchronous>, transform_indices = @transform_1, window_bounds = array<i64: 8, 64>}, {pipeline_mode = #tpu.pipeline_mode<synchronous>, transform_indices = @transform_2, window_bounds = array<i64: 1, 64>}, {pipeline_mode = #tpu.pipeline_mode<synchronous>, transform_indices = @transform_3, window_bounds = array<i64: 64, 128>}, {pipeline_mode = #tpu.pipeline_mode<synchronous>, transform_indices = @transform_4, window_bounds = array<i64: 1, 128>}, {pipeline_mode = #tpu.pipeline_mode<synchronous>, transform_indices = @transform_5, window_bounds = array<i64: 128, 64>}, {pipeline_mode = #tpu.pipeline_mode<synchronous>, transform_indices = @transform_6, window_bounds = array<i64: 1, 64>}, {pipeline_mode = #tpu.pipeline_mode<synchronous>, transform_indices = @transform_7, window_bounds = array<i64: 64, 128>}, {pipeline_mode = #tpu.pipeline_mode<synchronous>, transform_indices = @transform_8, window_bounds = array<i64: 1, 128>}, {pipeline_mode = #tpu.pipeline_mode<synchronous>, transform_indices = @transform_9, window_bounds = array<i64: 128, 1024>}, {pipeline_mode = #tpu.pipeline_mode<synchronous>, transform_indices = @transform_10, window_bounds = array<i64: 1, 1024>}, {transform_indices = @transform_11, window_bounds = array<i64: 1, 16, 128>}, {transform_indices = @transform_12, window_bounds = array<i64: 1, 1, 1024>}]} {
    %c0_i32 = arith.constant 0 : i32
    %0 = arith.cmpi eq, %arg1, %c0_i32 : i32
    %1 = arith.extui %0 : i1 to i32
    %c0_i32_0 = arith.constant 0 : i32
    %2 = arith.cmpi ne, %1, %c0_i32_0 : i32
    scf.if %2 {
      %cst_60 = arith.constant 0.000000e+00 : f32
      %81 = vector.broadcast %cst_60 : f32 to vector<1x1x1024xf32>
      %c0_61 = arith.constant 0 : index
      %c0_62 = arith.constant 0 : index
      %c0_63 = arith.constant 0 : index
      %82 = vector.load %arg14[%c0_61, %c0_62, %c0_63] : memref<1x1x1024xf32, #tpu.memory_space<vmem>>, vector<1x1x1024xf32>
      tpu.vector_store %arg14[%c0_61, %c0_62, %c0_63], %81 {strides = array<i32>} : memref<1x1x1024xf32, #tpu.memory_space<vmem>>, vector<1x1x1024xf32>,
    } else {
    }
    %c0 = arith.constant 0 : index
    %c0_1 = arith.constant 0 : index
    %c0_2 = arith.constant 0 : index
    %3 = vector.load %arg2[%c0, %c0_1, %c0_2] : memref<1x16x8xbf16, #tpu.memory_space<vmem>>, vector<1x16x8xbf16>
    %4 = vector.shape_cast %3 : vector<1x16x8xbf16> to vector<16x8xbf16>
    %c0_3 = arith.constant 0 : index
    %c0_4 = arith.constant 0 : index
    %5 = vector.load %arg3[%c0_3, %c0_4] : memref<8x64xbf16, #tpu.memory_space<vmem>>, vector<8x64xbf16>
    %c0_5 = arith.constant 0 : index
    %c0_6 = arith.constant 0 : index
    %6 = vector.load %arg4[%c0_5, %c0_6] : memref<1x64xf32, #tpu.memory_space<vmem>>, vector<1x64xf32>
    %cst = arith.constant dense<0.000000e+00> : vector<16x64xf32>
    %7 = tpu.matmul %4, %5, %cst {dimension_numbers = #tpu.dot_dimension_numbers<[1], [0], [0], [1], [0, 0, 1, 1], [], []>} : vector<16x8xbf16>, vector<8x64xbf16>, vector<16x64xf32> -> vector<16x64xf32>
    %8 = vector.broadcast %6 : vector<1x64xf32> to vector<16x64xf32>
    %9 = arith.addf %7, %8 : vector<16x64xf32>
    %cst_7 = arith.constant 0.000000e+00 : f32
    %10 = vector.broadcast %cst_7 : f32 to vector<16x64xf32>
    %11 = arith.maximumf %9, %10 : vector<16x64xf32>
    %12 = arith.truncf %11 : vector<16x64xf32> to vector<16x64xbf16>
    %c0_8 = arith.constant 0 : index
    %c0_9 = arith.constant 0 : index
    %13 = vector.load %arg5[%c0_8, %c0_9] : memref<64x128xbf16, #tpu.memory_space<vmem>>, vector<64x128xbf16>
    %c0_10 = arith.constant 0 : index
    %c0_11 = arith.constant 0 : index
    %14 = vector.load %arg6[%c0_10, %c0_11] : memref<1x128xf32, #tpu.memory_space<vmem>>, vector<1x128xf32>
    %cst_12 = arith.constant dense<0.000000e+00> : vector<16x128xf32>
    %15 = tpu.matmul %12, %13, %cst_12 {dimension_numbers = #tpu.dot_dimension_numbers<[1], [0], [0], [1], [0, 0, 1, 1], [], []>} : vector<16x64xbf16>, vector<64x128xbf16>, vector<16x128xf32> -> vector<16x128xf32>
    %16 = vector.broadcast %14 : vector<1x128xf32> to vector<16x128xf32>
    %17 = arith.addf %15, %16 : vector<16x128xf32>
    %cst_13 = arith.constant 0.000000e+00 : f32
    %18 = vector.broadcast %cst_13 : f32 to vector<16x128xf32>
    %19 = arith.maximumf %17, %18 : vector<16x128xf32>
    %20 = arith.truncf %19 : vector<16x128xf32> to vector<16x128xbf16>
    %c0_14 = arith.constant 0 : index
    %c0_15 = arith.constant 0 : index
    %c0_16 = arith.constant 0 : index
    %21 = vector.load %arg13[%c0_14, %c0_15, %c0_16] : memref<1x16x128xbf16, #tpu.memory_space<vmem>>, vector<1x16x128xbf16>
    %22 = vector.shape_cast %21 : vector<1x16x128xbf16> to vector<16x128xbf16>
    %23 = vector.shape_cast %20 : vector<16x128xbf16> to vector<1x16x128xbf16>
    tpu.vector_store %arg13[%c0_14, %c0_15, %c0_16], %23 {strides = array<i32>} : memref<1x16x128xbf16, #tpu.memory_space<vmem>>, vector<1x16x128xbf16>,
    %c0_17 = arith.constant 0 : index
    %c0_18 = arith.constant 0 : index
    %24 = vector.load %arg7[%c0_17, %c0_18] : memref<128x64xbf16, #tpu.memory_space<vmem>>, vector<128x64xbf16>
    %c0_19 = arith.constant 0 : index
    %c0_20 = arith.constant 0 : index
    %25 = vector.load %arg8[%c0_19, %c0_20] : memref<1x64xf32, #tpu.memory_space<vmem>>, vector<1x64xf32>
    %cst_21 = arith.constant dense<0.000000e+00> : vector<16x64xf32>
    %26 = tpu.matmul %20, %24, %cst_21 {dimension_numbers = #tpu.dot_dimension_numbers<[1], [0], [0], [1], [0, 0, 1, 1], [], []>} : vector<16x128xbf16>, vector<128x64xbf16>, vector<16x64xf32> -> vector<16x64xf32>
    %27 = vector.broadcast %25 : vector<1x64xf32> to vector<16x64xf32>
    %28 = arith.addf %26, %27 : vector<16x64xf32>
    %cst_22 = arith.constant 0.000000e+00 : f32
    %29 = vector.broadcast %cst_22 : f32 to vector<16x64xf32>
    %30 = arith.maximumf %28, %29 : vector<16x64xf32>
    %31 = arith.truncf %30 : vector<16x64xf32> to vector<16x64xbf16>
    %c0_23 = arith.constant 0 : index
    %c0_24 = arith.constant 0 : index
    %32 = vector.load %arg9[%c0_23, %c0_24] : memref<64x128xbf16, #tpu.memory_space<vmem>>, vector<64x128xbf16>
    %c0_25 = arith.constant 0 : index
    %c0_26 = arith.constant 0 : index
    %33 = vector.load %arg10[%c0_25, %c0_26] : memref<1x128xf32, #tpu.memory_space<vmem>>, vector<1x128xf32>
    %cst_27 = arith.constant dense<0.000000e+00> : vector<16x128xf32>
    %34 = tpu.matmul %31, %32, %cst_27 {dimension_numbers = #tpu.dot_dimension_numbers<[1], [0], [0], [1], [0, 0, 1, 1], [], []>} : vector<16x64xbf16>, vector<64x128xbf16>, vector<16x128xf32> -> vector<16x128xf32>
    %35 = vector.broadcast %33 : vector<1x128xf32> to vector<16x128xf32>
    %36 = arith.addf %34, %35 : vector<16x128xf32>
    %cst_28 = arith.constant 0.000000e+00 : f32
    %37 = vector.broadcast %cst_28 : f32 to vector<16x128xf32>
    %38 = arith.maximumf %36, %37 : vector<16x128xf32>
    %39 = arith.truncf %38 : vector<16x128xf32> to vector<16x128xbf16>
    %c0_29 = arith.constant 0 : index
    %c0_30 = arith.constant 0 : index
    %40 = vector.load %arg11[%c0_29, %c0_30] : memref<128x1024xbf16, #tpu.memory_space<vmem>>, vector<128x256xbf16>
    %cst_31 = arith.constant dense<0.000000e+00> : vector<16x256xf32>
    %41 = tpu.matmul %39, %40, %cst_31 {dimension_numbers = #tpu.dot_dimension_numbers<[1], [0], [0], [1], [0, 0, 1, 1], [], []>} : vector<16x128xbf16>, vector<128x256xbf16>, vector<16x256xf32> -> vector<16x256xf32>
    %c0_32 = arith.constant 0 : index
    %c0_33 = arith.constant 0 : index
    %42 = vector.load %arg12[%c0_32, %c0_33] : memref<1x1024xf32, #tpu.memory_space<vmem>>, vector<1x256xf32>
    %43 = vector.broadcast %42 : vector<1x256xf32> to vector<16x256xf32>
    %44 = arith.addf %41, %43 : vector<16x256xf32>
    %cst_34 = arith.constant 0.000000e+00 : f32
    %45 = vector.broadcast %cst_34 : f32 to vector<16x256xf32>
    %46 = arith.maximumf %44, %45 : vector<16x256xf32>
    %cst_35 = arith.constant dense<0xFF800000> : vector<256xf32>
    %47 = vector.multi_reduction <maximumf>, %46, %cst_35 [0] : vector<16x256xf32> to vector<256xf32>
    %48 = vector.shape_cast %47 : vector<256xf32> to vector<1x256xf32>
    %c0_36 = arith.constant 0 : index
    %c256 = arith.constant 256 : index
    %49 = vector.load %arg11[%c0_36, %c256] : memref<128x1024xbf16, #tpu.memory_space<vmem>>, vector<128x256xbf16>
    %cst_37 = arith.constant dense<0.000000e+00> : vector<16x256xf32>
    %50 = tpu.matmul %39, %49, %cst_37 {dimension_numbers = #tpu.dot_dimension_numbers<[1], [0], [0], [1], [0, 0, 1, 1], [], []>} : vector<16x128xbf16>, vector<128x256xbf16>, vector<16x256xf32> -> vector<16x256xf32>
    %c0_38 = arith.constant 0 : index
    %c256_39 = arith.constant 256 : index
    %51 = vector.load %arg12[%c0_38, %c256_39] : memref<1x1024xf32, #tpu.memory_space<vmem>>, vector<1x256xf32>
    %52 = vector.broadcast %51 : vector<1x256xf32> to vector<16x256xf32>
    %53 = arith.addf %50, %52 : vector<16x256xf32>
    %cst_40 = arith.constant 0.000000e+00 : f32
    %54 = vector.broadcast %cst_40 : f32 to vector<16x256xf32>
    %55 = arith.maximumf %53, %54 : vector<16x256xf32>
    %cst_41 = arith.constant dense<0xFF800000> : vector<256xf32>
    %56 = vector.multi_reduction <maximumf>, %55, %cst_41 [0] : vector<16x256xf32> to vector<256xf32>
    %57 = vector.shape_cast %56 : vector<256xf32> to vector<1x256xf32>
    %c0_42 = arith.constant 0 : index
    %c512 = arith.constant 512 : index
    %58 = vector.load %arg11[%c0_42, %c512] : memref<128x1024xbf16, #tpu.memory_space<vmem>>, vector<128x256xbf16>
    %cst_43 = arith.constant dense<0.000000e+00> : vector<16x256xf32>
    %59 = tpu.matmul %39, %58, %cst_43 {dimension_numbers = #tpu.dot_dimension_numbers<[1], [0], [0], [1], [0, 0, 1, 1], [], []>} : vector<16x128xbf16>, vector<128x256xbf16>, vector<16x256xf32> -> vector<16x256xf32>
    %c0_44 = arith.constant 0 : index
    %c512_45 = arith.constant 512 : index
    %60 = vector.load %arg12[%c0_44, %c512_45] : memref<1x1024xf32, #tpu.memory_space<vmem>>, vector<1x256xf32>
    %61 = vector.broadcast %60 : vector<1x256xf32> to vector<16x256xf32>
    %62 = arith.addf %59, %61 : vector<16x256xf32>
    %cst_46 = arith.constant 0.000000e+00 : f32
    %63 = vector.broadcast %cst_46 : f32 to vector<16x256xf32>
    %64 = arith.maximumf %62, %63 : vector<16x256xf32>
    %cst_47 = arith.constant dense<0xFF800000> : vector<256xf32>
    %65 = vector.multi_reduction <maximumf>, %64, %cst_47 [0] : vector<16x256xf32> to vector<256xf32>
    %66 = vector.shape_cast %65 : vector<256xf32> to vector<1x256xf32>
    %c0_48 = arith.constant 0 : index
    %c768 = arith.constant 768 : index
    %67 = vector.load %arg11[%c0_48, %c768] : memref<128x1024xbf16, #tpu.memory_space<vmem>>, vector<128x256xbf16>
    %cst_49 = arith.constant dense<0.000000e+00> : vector<16x256xf32>
    %68 = tpu.matmul %39, %67, %cst_49 {dimension_numbers = #tpu.dot_dimension_numbers<[1], [0], [0], [1], [0, 0, 1, 1], [], []>} : vector<16x128xbf16>, vector<128x256xbf16>, vector<16x256xf32> -> vector<16x256xf32>
    %c0_50 = arith.constant 0 : index
    %c768_51 = arith.constant 768 : index
    %69 = vector.load %arg12[%c0_50, %c768_51] : memref<1x1024xf32, #tpu.memory_space<vmem>>, vector<1x256xf32>
    %70 = vector.broadcast %69 : vector<1x256xf32> to vector<16x256xf32>
    %71 = arith.addf %68, %70 : vector<16x256xf32>
    %cst_52 = arith.constant 0.000000e+00 : f32
    %72 = vector.broadcast %cst_52 : f32 to vector<16x256xf32>
    %73 = arith.maximumf %71, %72 : vector<16x256xf32>
    %cst_53 = arith.constant dense<0xFF800000> : vector<256xf32>
    %74 = vector.multi_reduction <maximumf>, %73, %cst_53 [0] : vector<16x256xf32> to vector<256xf32>
    %75 = vector.shape_cast %74 : vector<256xf32> to vector<1x256xf32>
    %76 = tpu.concatenate %48, %57, %66, %75 in 1 : vector<1x256xf32>, vector<1x256xf32>, vector<1x256xf32>, vector<1x256xf32> -> vector<1x1024xf32>
    %c0_54 = arith.constant 0 : index
    %c0_55 = arith.constant 0 : index
    %c0_56 = arith.constant 0 : index
    %77 = vector.load %arg14[%c0_54, %c0_55, %c0_56] : memref<1x1x1024xf32, #tpu.memory_space<vmem>>, vector<1x1x1024xf32>
    %78 = vector.shape_cast %76 : vector<1x1024xf32> to vector<1x1x1024xf32>
    %79 = arith.maximumf %77, %78 : vector<1x1x1024xf32>
    %c0_57 = arith.constant 0 : index
    %c0_58 = arith.constant 0 : index
    %c0_59 = arith.constant 0 : index
    %80 = vector.load %arg14[%c0_57, %c0_58, %c0_59] : memref<1x1x1024xf32, #tpu.memory_space<vmem>>, vector<1x1x1024xf32>
    tpu.vector_store %arg14[%c0_57, %c0_58, %c0_59], %79 {strides = array<i32>} : memref<1x1x1024xf32, #tpu.memory_space<vmem>>, vector<1x1x1024xf32>,
    return
  }
  func.func @transform_0(%arg0: i32, %arg1: i32) -> (i32, i32, i32) {
    %c0_i32 = arith.constant 0 : i32
    %c0_i32_0 = arith.constant 0 : i32
    return %arg0, %arg1, %c0_i32 : i32, i32, i32
  }
  func.func @transform_1(%arg0: i32, %arg1: i32) -> (i32, i32) {
    %c0_i32 = arith.constant 0 : i32
    %c0_i32_0 = arith.constant 0 : i32
    %c0_i32_1 = arith.constant 0 : i32
    return %c0_i32, %c0_i32_0 : i32, i32
  }
  func.func @transform_2(%arg0: i32, %arg1: i32) -> (i32, i32) {
    %c0_i32 = arith.constant 0 : i32
    %c0_i32_0 = arith.constant 0 : i32
    %c0_i32_1 = arith.constant 0 : i32
    return %c0_i32, %c0_i32_0 : i32, i32
  }
  func.func @transform_3(%arg0: i32, %arg1: i32) -> (i32, i32) {
    %c0_i32 = arith.constant 0 : i32
    %c0_i32_0 = arith.constant 0 : i32
    %c0_i32_1 = arith.constant 0 : i32
    return %c0_i32, %c0_i32_0 : i32, i32
  }
  func.func @transform_4(%arg0: i32, %arg1: i32) -> (i32, i32) {
    %c0_i32 = arith.constant 0 : i32
    %c0_i32_0 = arith.constant 0 : i32
    %c0_i32_1 = arith.constant 0 : i32
    return %c0_i32, %c0_i32_0 : i32, i32
  }
  func.func @transform_5(%arg0: i32, %arg1: i32) -> (i32, i32) {
    %c0_i32 = arith.constant 0 : i32
    %c0_i32_0 = arith.constant 0 : i32
    %c0_i32_1 = arith.constant 0 : i32
    return %c0_i32, %c0_i32_0 : i32, i32
  }
  func.func @transform_6(%arg0: i32, %arg1: i32) -> (i32, i32) {
    %c0_i32 = arith.constant 0 : i32
    %c0_i32_0 = arith.constant 0 : i32
    %c0_i32_1 = arith.constant 0 : i32
    return %c0_i32, %c0_i32_0 : i32, i32
  }
  func.func @transform_7(%arg0: i32, %arg1: i32) -> (i32, i32) {
    %c0_i32 = arith.constant 0 : i32
    %c0_i32_0 = arith.constant 0 : i32
    %c0_i32_1 = arith.constant 0 : i32
    return %c0_i32, %c0_i32_0 : i32, i32
  }
  func.func @transform_8(%arg0: i32, %arg1: i32) -> (i32, i32) {
    %c0_i32 = arith.constant 0 : i32
    %c0_i32_0 = arith.constant 0 : i32
    %c0_i32_1 = arith.constant 0 : i32
    return %c0_i32, %c0_i32_0 : i32, i32
  }
  func.func @transform_9(%arg0: i32, %arg1: i32) -> (i32, i32) {
    %c0_i32 = arith.constant 0 : i32
    %c0_i32_0 = arith.constant 0 : i32
    %c0_i32_1 = arith.constant 0 : i32
    return %c0_i32, %c0_i32_0 : i32, i32
  }
  func.func @transform_10(%arg0: i32, %arg1: i32) -> (i32, i32) {
    %c0_i32 = arith.constant 0 : i32
    %c0_i32_0 = arith.constant 0 : i32
    %c0_i32_1 = arith.constant 0 : i32
    return %c0_i32, %c0_i32_0 : i32, i32
  }
  func.func @transform_11(%arg0: i32, %arg1: i32) -> (i32, i32, i32) {
    %c0_i32 = arith.constant 0 : i32
    %c0_i32_0 = arith.constant 0 : i32
    return %arg0, %arg1, %c0_i32 : i32, i32, i32
  }
  func.func @transform_12(%arg0: i32, %arg1: i32) -> (i32, i32, i32) {
    %c0_i32 = arith.constant 0 : i32
    %c0_i32_0 = arith.constant 0 : i32
    %c0_i32_1 = arith.constant 0 : i32
    return %arg0, %c0_i32, %c0_i32_0 : i32, i32, i32
  }
}

</mosaic_0001>

<llo_original>
// kernel: tpu_custom_call.1
$region0: #{tpu_custom_call.1}
  #allocation0 [shape = 'u32[]', space=smem, size = 0x4, offset = 0x4, fixed_abs, tag = 'smem constant byte address 0x4 - core index']
  #allocation1 [shape = 'u32[72,128]{1,0:T(1,128)}', space=vmem, size = 0x9000, scoped, tag = 'internal scratch']
  %s0 = inlined_call_operand.vmem [shape: bf16[4,16,8], index: 0, kind: input, shape index: {}]
  %s1 = inlined_call_operand.vmem [shape: bf16[8,64], index: 1, kind: input, shape index: {}]
  %s2 = inlined_call_operand.vmem [shape: f32[1,64], index: 2, kind: input, shape index: {}]
  %s3 = inlined_call_operand.vmem [shape: bf16[64,128], index: 3, kind: input, shape index: {}]
  %s4 = inlined_call_operand.vmem [shape: f32[1,128], index: 4, kind: input, shape index: {}]
  %s5 = inlined_call_operand.vmem [shape: bf16[128,64], index: 5, kind: input, shape index: {}]
  %s6 = inlined_call_operand.vmem [shape: f32[1,64], index: 6, kind: input, shape index: {}]
  %s7 = inlined_call_operand.vmem [shape: bf16[64,128], index: 7, kind: input, shape index: {}]
  %s8 = inlined_call_operand.vmem [shape: f32[1,128], index: 8, kind: input, shape index: {}]
  %s9 = inlined_call_operand.hbm [shape: bf16[128,1024], index: 9, kind: input, shape index: {}]
  %s10 = inlined_call_operand.vmem [shape: f32[1,1024], index: 10, kind: input, shape index: {}]
  %s11 = inlined_call_operand.hbm [shape: bf16[4,16,128], index: 11, kind: output, shape index: {0}]
  %s12 = inlined_call_operand.hbm [shape: f32[4,1,1024], index: 12, kind: output, shape index: {1}]
  %13 = xla_tuple %s11, %s12
  %s14 = sld [smem:[#allocation0]]
  $region93: #{tpu_custom_call.1} parent=0
    _
  %s16 = ssub.s32 1, %s14
  %s17 = scalar_select 0, %s16, %s14
  $region1: #{tpu_custom_call.1} parent=0
    #allocation2 [shape = 'u8[262144]{0}', space=vmem, size = 0x40000, scoped, tag = 'input window, operand 9, single buffered']
    #allocation3 [shape = 's32[2]{0}', space=sflag, size = 0x8, scoped, tag = 'scoped memory for tpu_custom_call.1']
    #allocation4 [shape = 's32[2]{0}', space=sflag, size = 0x8, scoped, tag = 'scoped memory for tpu_custom_call.1']
    #allocation5 [shape = 'u8[8192]{0}', space=vmem, size = 0x2000, scoped, tag = 'output window, operand 0']
    #allocation6 [shape = 'u8[8192]{0}', space=vmem, size = 0x2000, scoped, tag = 'output window, operand 1']
    #allocation7 [shape = 's32[2]{0}', space=sflag, size = 0x8, scoped, tag = 'scoped memory for tpu_custom_call.1']
    %18 = vsyncpa [#allocation3], 0
    %19 = vsyncpa [#allocation4], 0
    %s20 = scalar_lea.sflag [#allocation4], 1
    %21 = vsyncpa %s20, 0
    %22 = vsyncpa [#allocation7], 0
    %s23 = scalar_lea.sflag [#allocation7], 1
    %24 = vsyncpa %s23, 0
    loop: start=0, step=1, limit=6
    $region2: #{tpu_custom_call.1} parent=1 // loop_pre_header
      _
    $region3: #{tpu_custom_call.1} parent=1 // loop_header
      %s26 = sphi 0, %s30
      %p27 = scmp.ge.s32.totalorder %s26, 6
      %s33 = sphi 0, %s45
      %s34 = sphi 0, %s41
      %s35 = sphi 0, %s33
      %s36 = sphi 0, %s34
      %s37 = sphi 0, %s35
      %s38 = sphi 0, %s36
      %s50 = sphi 0, %s52
      %s53 = sphi 0, %s50
      %s54 = sphi 0, %s53
      %s70 = sphi 0, %s54
      %s74 = sphi 0, %s74
      %s76 = sphi 0, %s74
      %s77 = sphi 0, %s76
      %s91 = sphi 0, %s77
      %s95 = sphi 0, %s95
      %s97 = sphi 0, %s95
      %s98 = sphi 0, %s97
      %s112 = sphi 0, %s98
      %s116 = sphi 0, %s116
      %s118 = sphi 0, %s116
      %s119 = sphi 0, %s118
      %s133 = sphi 0, %s119
      %s137 = sphi 0, %s137
      %s139 = sphi 0, %s137
      %s140 = sphi 0, %s139
      %s154 = sphi 0, %s140
      %s158 = sphi 0, %s158
      %s160 = sphi 0, %s158
      %s161 = sphi 0, %s160
      %s175 = sphi 0, %s161
      %s179 = sphi 0, %s179
      %s181 = sphi 0, %s179
      %s182 = sphi 0, %s181
      %s196 = sphi 0, %s182
      %s200 = sphi 0, %s200
      %s202 = sphi 0, %s200
      %s203 = sphi 0, %s202
      %s217 = sphi 0, %s203
      %s221 = sphi 0, %s221
      %s223 = sphi 0, %s221
      %s224 = sphi 0, %s223
      %s238 = sphi 0, %s224
      %s242 = sphi 0, %s242
      %s244 = sphi 0, %s242
      %s245 = sphi 0, %s244
      %s259 = sphi 0, %s245
      %s263 = sphi 0, %s263
      %s265 = sphi 0, %s263
      %s266 = sphi 0, %s265
      %s280 = sphi 0, %s266
      %s288 = sphi 0, %s290
      %s291 = sphi 0, %s288
      %s292 = sphi 0, %s291
      %s308 = sphi 0, %s292
      %s314 = sphi 0, %s316
      %s317 = sphi 0, %s314
      %s318 = sphi 0, %s317
      %s334 = sphi 0, %s318
    $region4: #{tpu_custom_call.1} parent=1 // loop_header_branch
      %29 = sbr.rel (%p27) target = $region8
    $region5: #{tpu_custom_call.1} parent=1 // loop_body
      %s31 = ssub.s32 %s26, 1
      %s32 = ssub.s32 %s26, 2
      %s39 = sadd.s32 1, %s34
      %p40 = scmp.ge.s32.totalorder %s39, 1
      %s41 = scalar_select %p40, 0, %s39
      %s42 = sadd.s32 1, %s33
      %s43 = scalar_select %p40, %s42, %s33
      %p44 = scmp.ge.s32.totalorder %s43, 4
      %s45 = scalar_select %p44, 0, %s43
      %s46 = ssub.s32 %s33, %s45
      %s47 = ssub.s32 %s34, %s41
      %s48 = sor.u32 %s46, %s47
      %p49 = scmp.eq.s32.totalorder %s48, 0
      %s51 = sadd.s32 %s50, 1
      %s52 = scalar_select %p49, %s50, %s51
      %p55 = pneg %p49
      %p56 = scmp.eq.s32.totalorder %s26, 3
      %p57 = por %p55, %p56
      %p58 = scmp.ne.s32.totalorder %s50, %s53
      %p59 = scmp.eq.s32.totalorder %s26, 0
      %p60 = por %p58, %p59
      %p61 = scmp.ne.s32.totalorder %s50, %s53
      %p62 = scmp.eq.s32.totalorder %s31, 3
      %p63 = por %p61, %p62
      %p64 = scmp.ne.s32.totalorder %s53, %s54
      %p65 = scmp.eq.s32.totalorder %s31, 0
      %p66 = por %p64, %p65
      %p67 = scmp.ne.s32.totalorder %s53, %s54
      %p68 = scmp.eq.s32.totalorder %s32, 3
      %p69 = por %p67, %p68
      %p71 = scmp.ne.s32.totalorder %s54, %s70
      %p72 = scmp.eq.s32.totalorder %s32, 0
      %p73 = por %p71, %p72
      %s75 = sadd.s32 %s74, 1
      %p78 = scmp.eq.s32.totalorder %s26, 3
      %p79 = scmp.ne.s32.totalorder %s74, %s76
      %p80 = scmp.eq.s32.totalorder %s26, 0
      %p81 = por %p79, %p80
      %p82 = scmp.ne.s32.totalorder %s74, %s76
      %p83 = scmp.eq.s32.totalorder %s31, 3
      %p84 = por %p82, %p83
      %p85 = scmp.ne.s32.totalorder %s76, %s77
      %p86 = scmp.eq.s32.totalorder %s31, 0
      %p87 = por %p85, %p86
      %p88 = scmp.ne.s32.totalorder %s76, %s77
      %p89 = scmp.eq.s32.totalorder %s32, 3
      %p90 = por %p88, %p89
      %p92 = scmp.ne.s32.totalorder %s77, %s91
      %p93 = scmp.eq.s32.totalorder %s32, 0
      %p94 = por %p92, %p93
      %s96 = sadd.s32 %s95, 1
      %p99 = scmp.eq.s32.totalorder %s26, 3
      %p100 = scmp.ne.s32.totalorder %s95, %s97
      %p101 = scmp.eq.s32.totalorder %s26, 0
      %p102 = por %p100, %p101
      %p103 = scmp.ne.s32.totalorder %s95, %s97
      %p104 = scmp.eq.s32.totalorder %s31, 3
      %p105 = por %p103, %p104
      %p106 = scmp.ne.s32.totalorder %s97, %s98
      %p107 = scmp.eq.s32.totalorder %s31, 0
      %p108 = por %p106, %p107
      %p109 = scmp.ne.s32.totalorder %s97, %s98
      %p110 = scmp.eq.s32.totalorder %s32, 3
      %p111 = por %p109, %p110
      %p113 = scmp.ne.s32.totalorder %s98, %s112
      %p114 = scmp.eq.s32.totalorder %s32, 0
      %p115 = por %p113, %p114
      %s117 = sadd.s32 %s116, 1
      %p120 = scmp.eq.s32.totalorder %s26, 3
      %p121 = scmp.ne.s32.totalorder %s116, %s118
      %p122 = scmp.eq.s32.totalorder %s26, 0
      %p123 = por %p121, %p122
      %p124 = scmp.ne.s32.totalorder %s116, %s118
      %p125 = scmp.eq.s32.totalorder %s31, 3
      %p126 = por %p124, %p125
      %p127 = scmp.ne.s32.totalorder %s118, %s119
      %p128 = scmp.eq.s32.totalorder %s31, 0
      %p129 = por %p127, %p128
      %p130 = scmp.ne.s32.totalorder %s118, %s119
      %p131 = scmp.eq.s32.totalorder %s32, 3
      %p132 = por %p130, %p131
      %p134 = scmp.ne.s32.totalorder %s119, %s133
      %p135 = scmp.eq.s32.totalorder %s32, 0
      %p136 = por %p134, %p135
      %s138 = sadd.s32 %s137, 1
      %p141 = scmp.eq.s32.totalorder %s26, 3
      %p142 = scmp.ne.s32.totalorder %s137, %s139
      %p143 = scmp.eq.s32.totalorder %s26, 0
      %p144 = por %p142, %p143
      %p145 = scmp.ne.s32.totalorder %s137, %s139
      %p146 = scmp.eq.s32.totalorder %s31, 3
      %p147 = por %p145, %p146
      %p148 = scmp.ne.s32.totalorder %s139, %s140
      %p149 = scmp.eq.s32.totalorder %s31, 0
      %p150 = por %p148, %p149
      %p151 = scmp.ne.s32.totalorder %s139, %s140
      %p152 = scmp.eq.s32.totalorder %s32, 3
      %p153 = por %p151, %p152
      %p155 = scmp.ne.s32.totalorder %s140, %s154
      %p156 = scmp.eq.s32.totalorder %s32, 0
      %p157 = por %p155, %p156
      %s159 = sadd.s32 %s158, 1
      %p162 = scmp.eq.s32.totalorder %s26, 3
      %p163 = scmp.ne.s32.totalorder %s158, %s160
      %p164 = scmp.eq.s32.totalorder %s26, 0
      %p165 = por %p163, %p164
      %p166 = scmp.ne.s32.totalorder %s158, %s160
      %p167 = scmp.eq.s32.totalorder %s31, 3
      %p168 = por %p166, %p167
      %p169 = scmp.ne.s32.totalorder %s160, %s161
      %p170 = scmp.eq.s32.totalorder %s31, 0
      %p171 = por %p169, %p170
      %p172 = scmp.ne.s32.totalorder %s160, %s161
      %p173 = scmp.eq.s32.totalorder %s32, 3
      %p174 = por %p172, %p173
      %p176 = scmp.ne.s32.totalorder %s161, %s175
      %p177 = scmp.eq.s32.totalorder %s32, 0
      %p178 = por %p176, %p177
      %s180 = sadd.s32 %s179, 1
      %p183 = scmp.eq.s32.totalorder %s26, 3
      %p184 = scmp.ne.s32.totalorder %s179, %s181
      %p185 = scmp.eq.s32.totalorder %s26, 0
      %p186 = por %p184, %p185
      %p187 = scmp.ne.s32.totalorder %s179, %s181
      %p188 = scmp.eq.s32.totalorder %s31, 3
      %p189 = por %p187, %p188
      %p190 = scmp.ne.s32.totalorder %s181, %s182
      %p191 = scmp.eq.s32.totalorder %s31, 0
      %p192 = por %p190, %p191
      %p193 = scmp.ne.s32.totalorder %s181, %s182
      %p194 = scmp.eq.s32.totalorder %s32, 3
      %p195 = por %p193, %p194
      %p197 = scmp.ne.s32.totalorder %s182, %s196
      %p198 = scmp.eq.s32.totalorder %s32, 0
      %p199 = por %p197, %p198
      %s201 = sadd.s32 %s200, 1
      %p204 = scmp.eq.s32.totalorder %s26, 3
      %p205 = scmp.ne.s32.totalorder %s200, %s202
      %p206 = scmp.eq.s32.totalorder %s26, 0
      %p207 = por %p205, %p206
      %p208 = scmp.ne.s32.totalorder %s200, %s202
      %p209 = scmp.eq.s32.totalorder %s31, 3
      %p210 = por %p208, %p209
      %p211 = scmp.ne.s32.totalorder %s202, %s203
      %p212 = scmp.eq.s32.totalorder %s31, 0
      %p213 = por %p211, %p212
      %p214 = scmp.ne.s32.totalorder %s202, %s203
      %p215 = scmp.eq.s32.totalorder %s32, 3
      %p216 = por %p214, %p215
      %p218 = scmp.ne.s32.totalorder %s203, %s217
      %p219 = scmp.eq.s32.totalorder %s32, 0
      %p220 = por %p218, %p219
      %s222 = sadd.s32 %s221, 1
      %p225 = scmp.eq.s32.totalorder %s26, 3
      %p226 = scmp.ne.s32.totalorder %s221, %s223
      %p227 = scmp.eq.s32.totalorder %s26, 0
      %p228 = por %p226, %p227
      %p229 = scmp.ne.s32.totalorder %s221, %s223
      %p230 = scmp.eq.s32.totalorder %s31, 3
      %p231 = por %p229, %p230
      %p232 = scmp.ne.s32.totalorder %s223, %s224
      %p233 = scmp.eq.s32.totalorder %s31, 0
      %p234 = por %p232, %p233
      %p235 = scmp.ne.s32.totalorder %s223, %s224
      %p236 = scmp.eq.s32.totalorder %s32, 3
      %p237 = por %p235, %p236
      %p239 = scmp.ne.s32.totalorder %s224, %s238
      %p240 = scmp.eq.s32.totalorder %s32, 0
      %p241 = por %p239, %p240
      %s243 = sadd.s32 %s242, 1
      %p246 = scmp.eq.s32.totalorder %s26, 3
      %p247 = scmp.ne.s32.totalorder %s242, %s244
      %p248 = scmp.eq.s32.totalorder %s26, 0
      %p249 = por %p247, %p248
      %p250 = scmp.ne.s32.totalorder %s242, %s244
      %p251 = scmp.eq.s32.totalorder %s31, 3
      %p252 = por %p250, %p251
      %p253 = scmp.ne.s32.totalorder %s244, %s245
      %p254 = scmp.eq.s32.totalorder %s31, 0
      %p255 = por %p253, %p254
      %p256 = scmp.ne.s32.totalorder %s244, %s245
      %p257 = scmp.eq.s32.totalorder %s32, 3
      %p258 = por %p256, %p257
      %p260 = scmp.ne.s32.totalorder %s245, %s259
      %p261 = scmp.eq.s32.totalorder %s32, 0
      %p262 = por %p260, %p261
      %s264 = sadd.s32 %s263, 1
      %p267 = scmp.eq.s32.totalorder %s26, 3
      %p268 = scmp.ne.s32.totalorder %s263, %s265
      %p269 = scmp.eq.s32.totalorder %s26, 0
      %p270 = por %p268, %p269
      %p271 = scmp.ne.s32.totalorder %s263, %s265
      %p272 = scmp.eq.s32.totalorder %s31, 3
      %p273 = por %p271, %p272
      %p274 = scmp.ne.s32.totalorder %s265, %s266
      %p275 = scmp.eq.s32.totalorder %s31, 0
      %p276 = por %p274, %p275
      %p277 = scmp.ne.s32.totalorder %s265, %s266
      %p278 = scmp.eq.s32.totalorder %s32, 3
      %p279 = por %p277, %p278
      %p281 = scmp.ne.s32.totalorder %s266, %s280
      %p282 = scmp.eq.s32.totalorder %s32, 0
      %p283 = por %p281, %p282
      %s284 = ssub.s32 %s33, %s45
      %s285 = ssub.s32 %s34, %s41
      %s286 = sor.u32 %s284, %s285
      %p287 = scmp.eq.s32.totalorder %s286, 0
      %s289 = sadd.s32 %s288, 1
      %s290 = scalar_select %p287, %s288, %s289
      %p293 = pneg %p287
      %p294 = scmp.eq.s32.totalorder %s26, 3
      %p295 = por %p293, %p294
      %p296 = scmp.ne.s32.totalorder %s288, %s291
      %p297 = scmp.eq.s32.totalorder %s26, 0
      %p298 = por %p296, %p297
      %p299 = scmp.ne.s32.totalorder %s288, %s291
      %p300 = scmp.eq.s32.totalorder %s31, 3
      %p301 = por %p299, %p300
      %p302 = scmp.ne.s32.totalorder %s291, %s292
      %p303 = scmp.eq.s32.totalorder %s31, 0
      %p304 = por %p302, %p303
      %p305 = scmp.ne.s32.totalorder %s291, %s292
      %p306 = scmp.eq.s32.totalorder %s32, 3
      %p307 = por %p305, %p306
      %p309 = scmp.ne.s32.totalorder %s292, %s308
      %p310 = scmp.eq.s32.totalorder %s32, 0
      %p311 = por %p309, %p310
      %s312 = ssub.s32 %s33, %s45
      %p313 = scmp.eq.s32.totalorder %s312, 0
      %s315 = sadd.s32 %s314, 1
      %s316 = scalar_select %p313, %s314, %s315
      %p319 = pneg %p313
      %p320 = scmp.eq.s32.totalorder %s26, 3
      %p321 = por %p319, %p320
      %p322 = scmp.ne.s32.totalorder %s314, %s317
      %p323 = scmp.eq.s32.totalorder %s26, 0
      %p324 = por %p322, %p323
      %p325 = scmp.ne.s32.totalorder %s314, %s317
      %p326 = scmp.eq.s32.totalorder %s31, 3
      %p327 = por %p325, %p326
      %p328 = scmp.ne.s32.totalorder %s317, %s318
      %p329 = scmp.eq.s32.totalorder %s31, 0
      %p330 = por %p328, %p329
      %p331 = scmp.ne.s32.totalorder %s317, %s318
      %p332 = scmp.eq.s32.totalorder %s32, 3
      %p333 = por %p331, %p332
      %p335 = scmp.ne.s32.totalorder %s318, %s334
      %p336 = scmp.eq.s32.totalorder %s32, 0
      %p337 = por %p335, %p336
      %p338 = scmp.le.s32.totalorder 1, %s26
      %p339 = scmp.lt.s32.totalorder %s26, 5
      %p340 = pnand %p338, %p339
      %p341 = pneg %p340
      // Predicated region
      $region9: #{tpu_custom_call.1} parent=5 // pred_check
        _
      $region10: #{tpu_custom_call.1} parent=5 // pred_check_branch
        %343 = sbr.rel (%p340) target = $region12
      $region11: #{tpu_custom_call.1} parent=5 // pred_region
        %s344 = ssub.s32 %s26, 1
        // Predicated region
        $region13: #{tpu_custom_call.1} parent=11 // pred_check
          %p345 = pneg %p87
        $region14: #{tpu_custom_call.1} parent=11 // pred_check_branch
          %347 = sbr.rel (%p345) target = $region16
        $region15: #{tpu_custom_call.1} parent=11 // pred_region
          _
        $region16: #{tpu_custom_call.1} parent=11 // pred_fallthru
          _
        // Predicated region
        $region17: #{tpu_custom_call.1} parent=11 // pred_check
          %p348 = pneg %p108
        $region18: #{tpu_custom_call.1} parent=11 // pred_check_branch
          %350 = sbr.rel (%p348) target = $region20
        $region19: #{tpu_custom_call.1} parent=11 // pred_region
          _
        $region20: #{tpu_custom_call.1} parent=11 // pred_fallthru
          _
        // Predicated region
        $region21: #{tpu_custom_call.1} parent=11 // pred_check
          %p351 = pneg %p129
        $region22: #{tpu_custom_call.1} parent=11 // pred_check_branch
          %353 = sbr.rel (%p351) target = $region24
        $region23: #{tpu_custom_call.1} parent=11 // pred_region
          _
        $region24: #{tpu_custom_call.1} parent=11 // pred_fallthru
          _
        // Predicated region
        $region25: #{tpu_custom_call.1} parent=11 // pred_check
          %p354 = pneg %p150
        $region26: #{tpu_custom_call.1} parent=11 // pred_check_branch
          %356 = sbr.rel (%p354) target = $region28
        $region27: #{tpu_custom_call.1} parent=11 // pred_region
          _
        $region28: #{tpu_custom_call.1} parent=11 // pred_fallthru
          _
        // Predicated region
        $region29: #{tpu_custom_call.1} parent=11 // pred_check
          %p357 = pneg %p171
        $region30: #{tpu_custom_call.1} parent=11 // pred_check_branch
          %359 = sbr.rel (%p357) target = $region32
        $region31: #{tpu_custom_call.1} parent=11 // pred_region
          _
        $region32: #{tpu_custom_call.1} parent=11 // pred_fallthru
          _
        // Predicated region
        $region33: #{tpu_custom_call.1} parent=11 // pred_check
          %p360 = pneg %p192
        $region34: #{tpu_custom_call.1} parent=11 // pred_check_branch
          %362 = sbr.rel (%p360) target = $region36
        $region35: #{tpu_custom_call.1} parent=11 // pred_region
          _
        $region36: #{tpu_custom_call.1} parent=11 // pred_fallthru
          _
        // Predicated region
        $region37: #{tpu_custom_call.1} parent=11 // pred_check
          %p363 = pneg %p213
        $region38: #{tpu_custom_call.1} parent=11 // pred_check_branch
          %365 = sbr.rel (%p363) target = $region40
        $region39: #{tpu_custom_call.1} parent=11 // pred_region
          _
        $region40: #{tpu_custom_call.1} parent=11 // pred_fallthru
          _
        // Predicated region
        $region41: #{tpu_custom_call.1} parent=11 // pred_check
          %p366 = pneg %p234
        $region42: #{tpu_custom_call.1} parent=11 // pred_check_branch
          %368 = sbr.rel (%p366) target = $region44
        $region43: #{tpu_custom_call.1} parent=11 // pred_region
          _
        $region44: #{tpu_custom_call.1} parent=11 // pred_fallthru
          _
        // Predicated region
        $region45: #{tpu_custom_call.1} parent=11 // pred_check
          %p369 = pneg %p255
        $region46: #{tpu_custom_call.1} parent=11 // pred_check_branch
          %371 = sbr.rel (%p369) target = $region48
        $region47: #{tpu_custom_call.1} parent=11 // pred_region
          %373 = vsyncadd [#allocation3], 0
          %s374 = sshll.u32 %s9, 4
          %s375 = int_to_ptr.hbm [resolvable:$true] %s374
          %s376 = sshll.u32 [#allocation2], 4
          %s377 = int_to_ptr.vmem [resolvable:$true] %s376
          %382 = dma.hbm_to_vmem [thread:$0]  %s375, 8192, %s377, [#allocation3], 512, 512, 32
        $region48: #{tpu_custom_call.1} parent=11 // pred_fallthru
          _
        // Predicated region
        $region49: #{tpu_custom_call.1} parent=11 // pred_check
          %p383 = pneg %p276
        $region50: #{tpu_custom_call.1} parent=11 // pred_check_branch
          %385 = sbr.rel (%p383) target = $region52
        $region51: #{tpu_custom_call.1} parent=11 // pred_region
          _
        $region52: #{tpu_custom_call.1} parent=11 // pred_fallthru
          _
      $region12: #{tpu_custom_call.1} parent=5 // pred_fallthru
        _
      %p386 = scmp.lt.s32.totalorder %s26, 4
      // Predicated region
      $region53: #{tpu_custom_call.1} parent=5 // pred_check
        %p387 = pneg %p386
      $region54: #{tpu_custom_call.1} parent=5 // pred_check_branch
        %389 = sbr.rel (%p387) target = $region56
      $region55: #{tpu_custom_call.1} parent=5 // pred_region
        // Predicated region
        $region57: #{tpu_custom_call.1} parent=55 // pred_check
          %p390 = pneg %p60
        $region58: #{tpu_custom_call.1} parent=55 // pred_check_branch
          %392 = sbr.rel (%p390) target = $region60
        $region59: #{tpu_custom_call.1} parent=55 // pred_region
          %s393 = smul.u32 2, %s34
          %p394 = scmp.lt.s32.totalorder %s33, 3
          %s395 = scalar_select %p394, %s33, 3
          %p396 = scmp.lt.s32.totalorder %s393, 1
          %s397 = scalar_select %p396, %s393, 1
          %s398 = smul.addr %s395, 2
          %s399 = sadd.s32 %s397, %s398
          %s400 = smul.addr %s399, 4
          %s401 = scalar_lea.vmem %s0, %s400
          %s402 = smul.u32 2, %s34
        $region60: #{tpu_custom_call.1} parent=55 // pred_fallthru
          _
      $region56: #{tpu_custom_call.1} parent=5 // pred_fallthru
        _
      %p403 = scmp.le.s32.totalorder 1, %s26
      %p404 = scmp.lt.s32.totalorder %s26, 5
      %p405 = pnand %p403, %p404
      %p406 = pneg %p405
      // Predicated region
      $region61: #{tpu_custom_call.1} parent=5 // pred_check
        _
      $region62: #{tpu_custom_call.1} parent=5 // pred_check_branch
        %408 = sbr.rel (%p405) target = $region64
      $region63: #{tpu_custom_call.1} parent=5 // pred_region
        %s409 = ssub.s32 %s26, 1
        // Predicated region
        $region65: #{tpu_custom_call.1} parent=63 // pred_check
          %p410 = pneg %p255
        $region66: #{tpu_custom_call.1} parent=63 // pred_check_branch
          %412 = sbr.rel (%p410) target = $region68
        $region67: #{tpu_custom_call.1} parent=63 // pred_region
          %414 = dma.done [#allocation3], 8192
        $region68: #{tpu_custom_call.1} parent=63 // pred_fallthru
          _
        %s415 = smul.u32 2, %s36
        %p416 = scmp.lt.s32.totalorder %s35, 3
        %s417 = scalar_select %p416, %s35, 3
        %p418 = scmp.lt.s32.totalorder %s415, 1
        %s419 = scalar_select %p418, %s415, 1
        %s420 = smul.addr %s417, 2
        %s421 = sadd.s32 %s419, %s420
        %s422 = smul.addr %s421, 4
        %s423 = scalar_lea.vmem %s0, %s422
        %p424 = pneg %p66
        %p425 = pneg %p63
        %p426 = pneg %p87
        %p427 = pneg %p84
        %p428 = pneg %p108
        %p429 = pneg %p105
        %p430 = pneg %p129
        %p431 = pneg %p126
        %p432 = pneg %p150
        %p433 = pneg %p147
        %p434 = pneg %p171
        %p435 = pneg %p168
        %p436 = pneg %p192
        %p437 = pneg %p189
        %p438 = pneg %p213
        %p439 = pneg %p210
        %p440 = pneg %p234
        %p441 = pneg %p231
        %p442 = pneg %p255
        %p443 = pneg %p252
        %p444 = pneg %p276
        %p445 = pneg %p273
        %p446 = pneg %p304
        %p447 = pneg %p301
        %s448 = sand.u32 %s291, 1
        %s449 = scalar_lea.sflag [#allocation4], %s448
        %s450 = sand.u32 %s291, 1
        %s451 = smul.addr %s450, 8
        %s452 = scalar_lea.vmem [#allocation5], %s451
        %p453 = pneg %p330
        %p454 = pneg %p327
        %s455 = sand.u32 %s317, 1
        %s456 = scalar_lea.sflag [#allocation7], %s455
        %s457 = sand.u32 %s317, 1
        %s458 = smul.addr %s457, 8
        %s459 = scalar_lea.vmem [#allocation6], %s458
        %s460 = smul.u32 2, %s36
        %p461 = scmp.lt.s32.totalorder %s35, 3
        %s462 = scalar_select %p461, %s35, 3
        %p463 = scmp.lt.s32.totalorder %s460, 1
        %s464 = scalar_select %p463, %s460, 1
        %s465 = smul.addr %s462, 2
        %s466 = sadd.s32 %s464, %s465
        %s467 = smul.addr %s466, 4
        %s468 = scalar_lea.vmem %s0, %s467
        %s469 = smul.u32 2, %s36
        %s470 = smul.u32 2, %s36
        %p472 = scmp.eq.s32.totalorder %s36, 0
        // Predicated region
        $region69: #{tpu_custom_call.1} parent=63 // pred_check
          %p473 = pneg %p472
        $region70: #{tpu_custom_call.1} parent=63 // pred_check_branch
          %475 = sbr.rel (%p473) target = $region72
        $region71: #{tpu_custom_call.1} parent=63 // pred_region
          %476 = vst [vmem:[%s459] sm:$0xff] 0.0
        $region72: #{tpu_custom_call.1} parent=63 // pred_fallthru
          _
        %v477 = vld [vmem:[%s468] sm:$0xf]
        %v478 = vld [vmem:[%s468 + $0x4] sm:$0xf]
        %v479 = vld [vmem:[%s1] sm:$0xf]
        %v480 = vld [vmem:[%s2] sm:$0x1]
        %v482 = vperm.slane %v480, 0
        %v486 = vunpack.c.l.b16 %v477
        %v487 = vunpack.c.l.b16 %v478
        %v488 = vpack.c.b16 %v487, %v486
        %vm489 = vcmask 64512
        %v491 = vsel %vm489, %v488, 0
        %vm493 = vcmask 1043456
        %v495 = vsel %vm493, %v479, 0
        %497 = vmatpush.bf16.msra.mxu0 0
        %498 = vmatpush.bf16.msra.mxu0 0
        %499 = vmatpush.bf16.msra.mxu0 0
        %500 = vmatpush.bf16.msra.mxu0 0
        %501 = vmatpush.bf16.msra.mxu0 0
        %502 = vmatpush.bf16.msra.mxu0 0
        %503 = vmatpush.bf16.msra.mxu0 0
        %504 = vmatpush.bf16.msra.mxu0 %v495
        %505 = vmatmul.bf16.gmra.mxu0 %v491
        %v506 = vpop.f32.mrf.mxu0
        %v507 = vadd.f32 %v482, %v506
        %v508 = vpop.f32.mrf.mxu0
        %v509 = vadd.f32 %v482, %v508
        %510 = vdwg.mxu0
        %v511 = vmax.f32 %v507, 0.0
        %v512 = vmax.f32 %v509, 0.0
        %v513 = vpack.c.bf16 %v512, %v511
        %v514 = vld [vmem:[%s3] sm:$0xf]
        %v515 = vld [vmem:[%s3 + $0x4] sm:$0xf]
        %v516 = vld [vmem:[%s3 + $0x8] sm:$0xf]
        %v517 = vld [vmem:[%s3 + $0xc] sm:$0xf]
        %v518 = vld [vmem:[%s3 + $0x10] sm:$0xf]
        %v519 = vld [vmem:[%s3 + $0x14] sm:$0xf]
        %v520 = vld [vmem:[%s3 + $0x18] sm:$0xf]
        %v521 = vld [vmem:[%s3 + $0x1c] sm:$0xf]
        %v522 = vld [vmem:[%s4] sm:$0x1]
        %v524 = vperm.slane %v522, 0
        %v534 = vunpack.c.l.b16 %v514
        %v535 = vunpack.c.l.b16 %v515
        %v536 = vunpack.c.l.b16 %v516
        %v537 = vunpack.c.l.b16 %v517
        %v538 = vunpack.c.l.b16 %v518
        %v539 = vunpack.c.l.b16 %v519
        %v540 = vunpack.c.l.b16 %v520
        %v541 = vunpack.c.l.b16 %v521
        %v542 = vpack.c.b16 %v535, %v534
        %v543 = vpack.c.b16 %v537, %v536
        %v544 = vpack.c.b16 %v539, %v538
        %v545 = vpack.c.b16 %v541, %v540
        %vm550 = vcmask 523264
        %v552 = vsel %vm550, %v513, 0
        %554 = vmatpush.bf16.msra.mxu0 0
        %555 = vmatpush.bf16.msra.mxu0 0
        %556 = vmatpush.bf16.msra.mxu0 0
        %557 = vmatpush.bf16.msra.mxu0 0
        %558 = vmatpush.bf16.msra.mxu0 %v545
        %559 = vmatpush.bf16.msra.mxu0 %v544
        %560 = vmatpush.bf16.msra.mxu0 %v543
        %561 = vmatpush.bf16.msra.mxu0 %v542
        %562 = vmatmul.bf16.gmra.mxu0 %v552
        %v563 = vpop.f32.mrf.mxu0
        %v564 = vadd.f32 %v524, %v563
        %v565 = vpop.f32.mrf.mxu0
        %v566 = vadd.f32 %v524, %v565
        %567 = vdwg.mxu0
        %v568 = vmax.f32 %v564, 0.0
        %v569 = vmax.f32 %v566, 0.0
        %v570 = vpack.c.bf16 %v568, %v568
        %v571 = vpack.c.bf16 %v569, %v569
        %572 = vst [vmem:[%s452] sm:$0xf] %v570
        %573 = vst [vmem:[%s452 + $0x4] sm:$0xf] %v571
        %v574 = vld [vmem:[%s5] sm:$0xf]
        %v575 = vld [vmem:[%s5 + $0x4] sm:$0xf]
        %v576 = vld [vmem:[%s5 + $0x8] sm:$0xf]
        %v577 = vld [vmem:[%s5 + $0xc] sm:$0xf]
        %v578 = vld [vmem:[%s5 + $0x10] sm:$0xf]
        %v579 = vld [vmem:[%s5 + $0x14] sm:$0xf]
        %v580 = vld [vmem:[%s5 + $0x18] sm:$0xf]
        %v581 = vld [vmem:[%s5 + $0x1c] sm:$0xf]
        %v582 = vld [vmem:[%s5 + $0x20] sm:$0xf]
        %v583 = vld [vmem:[%s5 + $0x24] sm:$0xf]
        %v584 = vld [vmem:[%s5 + $0x28] sm:$0xf]
        %v585 = vld [vmem:[%s5 + $0x2c] sm:$0xf]
        %v586 = vld [vmem:[%s5 + $0x30] sm:$0xf]
        %v587 = vld [vmem:[%s5 + $0x34] sm:$0xf]
        %v588 = vld [vmem:[%s5 + $0x38] sm:$0xf]
        %v589 = vld [vmem:[%s5 + $0x3c] sm:$0xf]
        %v590 = vld [vmem:[%s6] sm:$0x1]
        %v592 = vperm.slane %v590, 0
        %v596 = vunpack.c.l.b16 %v570
        %v597 = vunpack.c.l.b16 %v571
        %v598 = vpack.c.b16 %v597, %v596
        %v616 = vunpack.c.l.b16 %v574
        %v617 = vunpack.c.l.b16 %v575
        %v618 = vunpack.c.l.b16 %v576
        %v619 = vunpack.c.l.b16 %v577
        %v620 = vunpack.c.l.b16 %v578
        %v621 = vunpack.c.l.b16 %v579
        %v622 = vunpack.c.l.b16 %v580
        %v623 = vunpack.c.l.b16 %v581
        %v624 = vunpack.c.l.b16 %v582
        %v625 = vunpack.c.l.b16 %v583
        %v626 = vunpack.c.l.b16 %v584
        %v627 = vunpack.c.l.b16 %v585
        %v628 = vunpack.c.l.b16 %v586
        %v629 = vunpack.c.l.b16 %v587
        %v630 = vunpack.c.l.b16 %v588
        %v631 = vunpack.c.l.b16 %v589
        %v632 = vpack.c.b16 %v617, %v616
        %v633 = vpack.c.b16 %v619, %v618
        %v634 = vpack.c.b16 %v621, %v620
        %v635 = vpack.c.b16 %v623, %v622
        %v636 = vpack.c.b16 %v625, %v624
        %v637 = vpack.c.b16 %v627, %v626
        %v638 = vpack.c.b16 %v629, %v628
        %v639 = vpack.c.b16 %v631, %v630
        %648 = vmatpush.bf16.msra.mxu0 %v639
        %649 = vmatpush.bf16.msra.mxu0 %v638
        %650 = vmatpush.bf16.msra.mxu0 %v637
        %651 = vmatpush.bf16.msra.mxu0 %v636
        %652 = vmatpush.bf16.msra.mxu0 %v635
        %653 = vmatpush.bf16.msra.mxu0 %v634
        %654 = vmatpush.bf16.msra.mxu0 %v633
        %655 = vmatpush.bf16.msra.mxu0 %v632
        %656 = vmatmul.bf16.gmra.mxu0 %v598
        %v657 = vpop.f32.mrf.mxu0
        %v658 = vadd.f32 %v592, %v657
        %v659 = vpop.f32.mrf.mxu0
        %v660 = vadd.f32 %v592, %v659
        %661 = vdwg.mxu0
        %v662 = vmax.f32 %v658, 0.0
        %v663 = vmax.f32 %v660, 0.0
        %v664 = vpack.c.bf16 %v663, %v662
        %v665 = vld [vmem:[%s7] sm:$0xf]
        %v666 = vld [vmem:[%s7 + $0x4] sm:$0xf]
        %v667 = vld [vmem:[%s7 + $0x8] sm:$0xf]
        %v668 = vld [vmem:[%s7 + $0xc] sm:$0xf]
        %v669 = vld [vmem:[%s7 + $0x10] sm:$0xf]
        %v670 = vld [vmem:[%s7 + $0x14] sm:$0xf]
        %v671 = vld [vmem:[%s7 + $0x18] sm:$0xf]
        %v672 = vld [vmem:[%s7 + $0x1c] sm:$0xf]
        %v673 = vld [vmem:[%s8] sm:$0x1]
        %v675 = vperm.slane %v673, 0
        %v685 = vunpack.c.l.b16 %v665
        %v686 = vunpack.c.l.b16 %v666
        %v687 = vunpack.c.l.b16 %v667
        %v688 = vunpack.c.l.b16 %v668
        %v689 = vunpack.c.l.b16 %v669
        %v690 = vunpack.c.l.b16 %v670
        %v691 = vunpack.c.l.b16 %v671
        %v692 = vunpack.c.l.b16 %v672
        %v693 = vpack.c.b16 %v686, %v685
        %v694 = vpack.c.b16 %v688, %v687
        %v695 = vpack.c.b16 %v690, %v689
        %v696 = vpack.c.b16 %v692, %v691
        %v702 = vsel %vm550, %v664, 0
        %704 = vmatpush.bf16.msra.mxu0 0
        %705 = vmatpush.bf16.msra.mxu0 0
        %706 = vmatpush.bf16.msra.mxu0 0
        %707 = vmatpush.bf16.msra.mxu0 0
        %708 = vmatpush.bf16.msra.mxu0 %v696
        %709 = vmatpush.bf16.msra.mxu0 %v695
        %710 = vmatpush.bf16.msra.mxu0 %v694
        %711 = vmatpush.bf16.msra.mxu0 %v693
        %712 = vmatmul.bf16.gmra.mxu0 %v702
        %v713 = vpop.f32.mrf.mxu0
        %v714 = vadd.f32 %v675, %v713
        %v715 = vpop.f32.mrf.mxu0
        %v716 = vadd.f32 %v675, %v715
        %717 = vdwg.mxu0
        %v718 = vmax.f32 %v714, 0.0
        %v719 = vmax.f32 %v716, 0.0
        %v720 = vpack.c.bf16 %v719, %v718
        %v721 = vld [vmem:[#allocation2] sm:$0xff]
        %v722 = vld [vmem:[#allocation2 + $0x20] sm:$0xff]
        %v723 = vld [vmem:[#allocation2 + $0x40] sm:$0xff]
        %v724 = vld [vmem:[#allocation2 + $0x60] sm:$0xff]
        %v725 = vld [vmem:[#allocation2 + $0x80] sm:$0xff]
        %v726 = vld [vmem:[#allocation2 + $0xa0] sm:$0xff]
        %v727 = vld [vmem:[#allocation2 + $0xc0] sm:$0xff]
        %v728 = vld [vmem:[#allocation2 + $0xe0] sm:$0xff]
        %v729 = vld [vmem:[#allocation2 + $0x100] sm:$0xff]
        %v730 = vld [vmem:[#allocation2 + $0x120] sm:$0xff]
        %v731 = vld [vmem:[#allocation2 + $0x140] sm:$0xff]
        %v732 = vld [vmem:[#allocation2 + $0x160] sm:$0xff]
        %v733 = vld [vmem:[#allocation2 + $0x180] sm:$0xff]
        %v734 = vld [vmem:[#allocation2 + $0x1a0] sm:$0xff]
        %v735 = vld [vmem:[#allocation2 + $0x1c0] sm:$0xff]
        %v736 = vld [vmem:[#allocation2 + $0x1e0] sm:$0xff]
        %v737 = vld [vmem:[%s10] sm:$0x3]
        %v739 = vperm.slane %v737, 0
        %v740 = vperm.slane %v737, 1
        %v759 = vunpack.c.l.b16 %v721
        %v760 = vunpack.c.h.b16 %v721
        %v761 = vunpack.c.l.b16 %v722
        %v762 = vunpack.c.h.b16 %v722
        %v763 = vunpack.c.l.b16 %v723
        %v764 = vunpack.c.h.b16 %v723
        %v765 = vunpack.c.l.b16 %v724
        %v766 = vunpack.c.h.b16 %v724
        %v767 = vunpack.c.l.b16 %v725
        %v768 = vunpack.c.h.b16 %v725
        %v769 = vunpack.c.l.b16 %v726
        %v770 = vunpack.c.h.b16 %v726
        %v771 = vunpack.c.l.b16 %v727
        %v772 = vunpack.c.h.b16 %v727
        %v773 = vunpack.c.l.b16 %v728
        %v774 = vunpack.c.h.b16 %v728
        %v775 = vunpack.c.l.b16 %v729
        %v776 = vunpack.c.h.b16 %v729
        %v777 = vunpack.c.l.b16 %v730
        %v778 = vunpack.c.h.b16 %v730
        %v779 = vunpack.c.l.b16 %v731
        %v780 = vunpack.c.h.b16 %v731
        %v781 = vunpack.c.l.b16 %v732
        %v782 = vunpack.c.h.b16 %v732
        %v783 = vunpack.c.l.b16 %v733
        %v784 = vunpack.c.h.b16 %v733
        %v785 = vunpack.c.l.b16 %v734
        %v786 = vunpack.c.h.b16 %v734
        %v787 = vunpack.c.l.b16 %v735
        %v788 = vunpack.c.h.b16 %v735
        %v789 = vunpack.c.l.b16 %v736
        %v790 = vunpack.c.h.b16 %v736
        %v791 = vpack.c.b16 %v761, %v759
        %v792 = vpack.c.b16 %v762, %v760
        %v793 = vpack.c.b16 %v765, %v763
        %v794 = vpack.c.b16 %v766, %v764
        %v795 = vpack.c.b16 %v769, %v767
        %v796 = vpack.c.b16 %v770, %v768
        %v797 = vpack.c.b16 %v773, %v771
        %v798 = vpack.c.b16 %v774, %v772
        %v799 = vpack.c.b16 %v777, %v775
        %v800 = vpack.c.b16 %v778, %v776
        %v801 = vpack.c.b16 %v781, %v779
        %v802 = vpack.c.b16 %v782, %v780
        %v803 = vpack.c.b16 %v785, %v783
        %v804 = vpack.c.b16 %v786, %v784
        %v805 = vpack.c.b16 %v789, %v787
        %v806 = vpack.c.b16 %v790, %v788
        %823 = vmatpush.bf16.msra.mxu0 %v805
        %824 = vmatpush.bf16.msra.mxu0 %v803
        %825 = vmatpush.bf16.msra.mxu0 %v801
        %826 = vmatpush.bf16.msra.mxu0 %v799
        %827 = vmatpush.bf16.msra.mxu0 %v797
        %828 = vmatpush.bf16.msra.mxu0 %v795
        %829 = vmatpush.bf16.msra.mxu0 %v793
        %830 = vmatpush.bf16.msra.mxu0 %v791
        %831 = vmatmul.bf16.gmra.mxu0 %v720
        %v832 = vpop.f32.mrf.mxu0
        %v833 = vadd.f32 %v739, %v832
        %v834 = vpop.f32.mrf.mxu0
        %v835 = vadd.f32 %v739, %v834
        %836 = vdwg.mxu0
        %837 = vmatpush.bf16.msra.mxu0 %v806
        %838 = vmatpush.bf16.msra.mxu0 %v804
        %839 = vmatpush.bf16.msra.mxu0 %v802
        %840 = vmatpush.bf16.msra.mxu0 %v800
        %841 = vmatpush.bf16.msra.mxu0 %v798
        %842 = vmatpush.bf16.msra.mxu0 %v796
        %843 = vmatpush.bf16.msra.mxu0 %v794
        %844 = vmatpush.bf16.msra.mxu0 %v792
        %845 = vmatmul.bf16.gmra.mxu0 %v720
        %v846 = vpop.f32.mrf.mxu0
        %v847 = vadd.f32 %v740, %v846
        %v848 = vpop.f32.mrf.mxu0
        %v849 = vadd.f32 %v740, %v848
        %850 = vdwg.mxu0
        %v851 = vmax.f32 %v833, 0.0
        %v852 = vmax.f32 %v847, 0.0
        %v853 = vmax.f32 %v835, 0.0
        %v854 = vmax.f32 %v849, 0.0
        %v855 = vmax.f32 %v851, %v853
        %v856 = vrot.slane %v855, 4
        %v857 = vmax.f32 %v855, %v856
        %v858 = vrot.slane %v857, 2
        %v859 = vmax.f32 %v857, %v858
        %v860 = vrot.slane %v859, 1
        %v861 = vmax.f32 %v859, %v860
        %v862 = vmax.f32 %v852, %v854
        %v863 = vrot.slane %v862, 4
        %v864 = vmax.f32 %v862, %v863
        %v865 = vrot.slane %v864, 2
        %v866 = vmax.f32 %v864, %v865
        %v867 = vrot.slane %v866, 1
        %v868 = vmax.f32 %v866, %v867
        %v869 = vld [vmem:[#allocation2 + $0x8] sm:$0xff]
        %v870 = vld [vmem:[#allocation2 + $0x28] sm:$0xff]
        %v871 = vld [vmem:[#allocation2 + $0x48] sm:$0xff]
        %v872 = vld [vmem:[#allocation2 + $0x68] sm:$0xff]
        %v873 = vld [vmem:[#allocation2 + $0x88] sm:$0xff]
        %v874 = vld [vmem:[#allocation2 + $0xa8] sm:$0xff]
        %v875 = vld [vmem:[#allocation2 + $0xc8] sm:$0xff]
        %v876 = vld [vmem:[#allocation2 + $0xe8] sm:$0xff]
        %v877 = vld [vmem:[#allocation2 + $0x108] sm:$0xff]
        %v878 = vld [vmem:[#allocation2 + $0x128] sm:$0xff]
        %v879 = vld [vmem:[#allocation2 + $0x148] sm:$0xff]
        %v880 = vld [vmem:[#allocation2 + $0x168] sm:$0xff]
        %v881 = vld [vmem:[#allocation2 + $0x188] sm:$0xff]
        %v882 = vld [vmem:[#allocation2 + $0x1a8] sm:$0xff]
        %v883 = vld [vmem:[#allocation2 + $0x1c8] sm:$0xff]
        %v884 = vld [vmem:[#allocation2 + $0x1e8] sm:$0xff]
        %v885 = vld [vmem:[%s10 + $0x2] sm:$0x3]
        %v887 = vperm.slane %v885, 0
        %v888 = vperm.slane %v885, 1
        %v907 = vunpack.c.l.b16 %v869
        %v908 = vunpack.c.h.b16 %v869
        %v909 = vunpack.c.l.b16 %v870
        %v910 = vunpack.c.h.b16 %v870
        %v911 = vunpack.c.l.b16 %v871
        %v912 = vunpack.c.h.b16 %v871
        %v913 = vunpack.c.l.b16 %v872
        %v914 = vunpack.c.h.b16 %v872
        %v915 = vunpack.c.l.b16 %v873
        %v916 = vunpack.c.h.b16 %v873
        %v917 = vunpack.c.l.b16 %v874
        %v918 = vunpack.c.h.b16 %v874
        %v919 = vunpack.c.l.b16 %v875
        %v920 = vunpack.c.h.b16 %v875
        %v921 = vunpack.c.l.b16 %v876
        %v922 = vunpack.c.h.b16 %v876
        %v923 = vunpack.c.l.b16 %v877
        %v924 = vunpack.c.h.b16 %v877
        %v925 = vunpack.c.l.b16 %v878
        %v926 = vunpack.c.h.b16 %v878
        %v927 = vunpack.c.l.b16 %v879
        %v928 = vunpack.c.h.b16 %v879
        %v929 = vunpack.c.l.b16 %v880
        %v930 = vunpack.c.h.b16 %v880
        %v931 = vunpack.c.l.b16 %v881
        %v932 = vunpack.c.h.b16 %v881
        %v933 = vunpack.c.l.b16 %v882
        %v934 = vunpack.c.h.b16 %v882
        %v935 = vunpack.c.l.b16 %v883
        %v936 = vunpack.c.h.b16 %v883
        %v937 = vunpack.c.l.b16 %v884
        %v938 = vunpack.c.h.b16 %v884
        %v939 = vpack.c.b16 %v909, %v907
        %v940 = vpack.c.b16 %v910, %v908
        %v941 = vpack.c.b16 %v913, %v911
        %v942 = vpack.c.b16 %v914, %v912
        %v943 = vpack.c.b16 %v917, %v915
        %v944 = vpack.c.b16 %v918, %v916
        %v945 = vpack.c.b16 %v921, %v919
        %v946 = vpack.c.b16 %v922, %v920
        %v947 = vpack.c.b16 %v925, %v923
        %v948 = vpack.c.b16 %v926, %v924
        %v949 = vpack.c.b16 %v929, %v927
        %v950 = vpack.c.b16 %v930, %v928
        %v951 = vpack.c.b16 %v933, %v931
        %v952 = vpack.c.b16 %v934, %v932
        %v953 = vpack.c.b16 %v937, %v935
        %v954 = vpack.c.b16 %v938, %v936
        %971 = vmatpush.bf16.msra.mxu0 %v953
        %972 = vmatpush.bf16.msra.mxu0 %v951
        %973 = vmatpush.bf16.msra.mxu0 %v949
        %974 = vmatpush.bf16.msra.mxu0 %v947
        %975 = vmatpush.bf16.msra.mxu0 %v945
        %976 = vmatpush.bf16.msra.mxu0 %v943
        %977 = vmatpush.bf16.msra.mxu0 %v941
        %978 = vmatpush.bf16.msra.mxu0 %v939
        %979 = vmatmul.bf16.gmra.mxu0 %v720
        %v980 = vpop.f32.mrf.mxu0
        %v981 = vadd.f32 %v887, %v980
        %v982 = vpop.f32.mrf.mxu0
        %v983 = vadd.f32 %v887, %v982
        %984 = vdwg.mxu0
        %985 = vmatpush.bf16.msra.mxu0 %v954
        %986 = vmatpush.bf16.msra.mxu0 %v952
        %987 = vmatpush.bf16.msra.mxu0 %v950
        %988 = vmatpush.bf16.msra.mxu0 %v948
        %989 = vmatpush.bf16.msra.mxu0 %v946
        %990 = vmatpush.bf16.msra.mxu0 %v944
        %991 = vmatpush.bf16.msra.mxu0 %v942
        %992 = vmatpush.bf16.msra.mxu0 %v940
        %993 = vmatmul.bf16.gmra.mxu0 %v720
        %v994 = vpop.f32.mrf.mxu0
        %v995 = vadd.f32 %v888, %v994
        %v996 = vpop.f32.mrf.mxu0
        %v997 = vadd.f32 %v888, %v996
        %998 = vdwg.mxu0
        %v999 = vmax.f32 %v981, 0.0
        %v1000 = vmax.f32 %v995, 0.0
        %v1001 = vmax.f32 %v983, 0.0
        %v1002 = vmax.f32 %v997, 0.0
        %v1003 = vmax.f32 %v999, %v1001
        %v1004 = vrot.slane %v1003, 4
        %v1005 = vmax.f32 %v1003, %v1004
        %v1006 = vrot.slane %v1005, 2
        %v1007 = vmax.f32 %v1005, %v1006
        %v1008 = vrot.slane %v1007, 1
        %v1009 = vmax.f32 %v1007, %v1008
        %v1010 = vmax.f32 %v1000, %v1002
        %v1011 = vrot.slane %v1010, 4
        %v1012 = vmax.f32 %v1010, %v1011
        %v1013 = vrot.slane %v1012, 2
        %v1014 = vmax.f32 %v1012, %v1013
        %v1015 = vrot.slane %v1014, 1
        %v1016 = vmax.f32 %v1014, %v1015
        %v1017 = vld [vmem:[#allocation2 + $0x10] sm:$0xff]
        %v1018 = vld [vmem:[#allocation2 + $0x30] sm:$0xff]
        %v1019 = vld [vmem:[#allocation2 + $0x50] sm:$0xff]
        %v1020 = vld [vmem:[#allocation2 + $0x70] sm:$0xff]
        %v1021 = vld [vmem:[#allocation2 + $0x90] sm:$0xff]
        %v1022 = vld [vmem:[#allocation2 + $0xb0] sm:$0xff]
        %v1023 = vld [vmem:[#allocation2 + $0xd0] sm:$0xff]
        %v1024 = vld [vmem:[#allocation2 + $0xf0] sm:$0xff]
        %v1025 = vld [vmem:[#allocation2 + $0x110] sm:$0xff]
        %v1026 = vld [vmem:[#allocation2 + $0x130] sm:$0xff]
        %v1027 = vld [vmem:[#allocation2 + $0x150] sm:$0xff]
        %v1028 = vld [vmem:[#allocation2 + $0x170] sm:$0xff]
        %v1029 = vld [vmem:[#allocation2 + $0x190] sm:$0xff]
        %v1030 = vld [vmem:[#allocation2 + $0x1b0] sm:$0xff]
        %v1031 = vld [vmem:[#allocation2 + $0x1d0] sm:$0xff]
        %v1032 = vld [vmem:[#allocation2 + $0x1f0] sm:$0xff]
        %v1033 = vld [vmem:[%s10 + $0x4] sm:$0x3]
        %v1035 = vperm.slane %v1033, 0
        %v1036 = vperm.slane %v1033, 1
        %v1055 = vunpack.c.l.b16 %v1017
        %v1056 = vunpack.c.h.b16 %v1017
        %v1057 = vunpack.c.l.b16 %v1018
        %v1058 = vunpack.c.h.b16 %v1018
        %v1059 = vunpack.c.l.b16 %v1019
        %v1060 = vunpack.c.h.b16 %v1019
        %v1061 = vunpack.c.l.b16 %v1020
        %v1062 = vunpack.c.h.b16 %v1020
        %v1063 = vunpack.c.l.b16 %v1021
        %v1064 = vunpack.c.h.b16 %v1021
        %v1065 = vunpack.c.l.b16 %v1022
        %v1066 = vunpack.c.h.b16 %v1022
        %v1067 = vunpack.c.l.b16 %v1023
        %v1068 = vunpack.c.h.b16 %v1023
        %v1069 = vunpack.c.l.b16 %v1024
        %v1070 = vunpack.c.h.b16 %v1024
        %v1071 = vunpack.c.l.b16 %v1025
        %v1072 = vunpack.c.h.b16 %v1025
        %v1073 = vunpack.c.l.b16 %v1026
        %v1074 = vunpack.c.h.b16 %v1026
        %v1075 = vunpack.c.l.b16 %v1027
        %v1076 = vunpack.c.h.b16 %v1027
        %v1077 = vunpack.c.l.b16 %v1028
        %v1078 = vunpack.c.h.b16 %v1028
        %v1079 = vunpack.c.l.b16 %v1029
        %v1080 = vunpack.c.h.b16 %v1029
        %v1081 = vunpack.c.l.b16 %v1030
        %v1082 = vunpack.c.h.b16 %v1030
        %v1083 = vunpack.c.l.b16 %v1031
        %v1084 = vunpack.c.h.b16 %v1031
        %v1085 = vunpack.c.l.b16 %v1032
        %v1086 = vunpack.c.h.b16 %v1032
        %v1087 = vpack.c.b16 %v1057, %v1055
        %v1088 = vpack.c.b16 %v1058, %v1056
        %v1089 = vpack.c.b16 %v1061, %v1059
        %v1090 = vpack.c.b16 %v1062, %v1060
        %v1091 = vpack.c.b16 %v1065, %v1063
        %v1092 = vpack.c.b16 %v1066, %v1064
        %v1093 = vpack.c.b16 %v1069, %v1067
        %v1094 = vpack.c.b16 %v1070, %v1068
        %v1095 = vpack.c.b16 %v1073, %v1071
        %v1096 = vpack.c.b16 %v1074, %v1072
        %v1097 = vpack.c.b16 %v1077, %v1075
        %v1098 = vpack.c.b16 %v1078, %v1076
        %v1099 = vpack.c.b16 %v1081, %v1079
        %v1100 = vpack.c.b16 %v1082, %v1080
        %v1101 = vpack.c.b16 %v1085, %v1083
        %v1102 = vpack.c.b16 %v1086, %v1084
        %1119 = vmatpush.bf16.msra.mxu0 %v1101
        %1120 = vmatpush.bf16.msra.mxu0 %v1099
        %1121 = vmatpush.bf16.msra.mxu0 %v1097
        %1122 = vmatpush.bf16.msra.mxu0 %v1095
        %1123 = vmatpush.bf16.msra.mxu0 %v1093
        %1124 = vmatpush.bf16.msra.mxu0 %v1091
        %1125 = vmatpush.bf16.msra.mxu0 %v1089
        %1126 = vmatpush.bf16.msra.mxu0 %v1087
        %1127 = vmatmul.bf16.gmra.mxu0 %v720
        %v1128 = vpop.f32.mrf.mxu0
        %v1129 = vadd.f32 %v1035, %v1128
        %v1130 = vpop.f32.mrf.mxu0
        %v1131 = vadd.f32 %v1035, %v1130
        %1132 = vdwg.mxu0
        %1133 = vmatpush.bf16.msra.mxu0 %v1102
        %1134 = vmatpush.bf16.msra.mxu0 %v1100
        %1135 = vmatpush.bf16.msra.mxu0 %v1098
        %1136 = vmatpush.bf16.msra.mxu0 %v1096
        %1137 = vmatpush.bf16.msra.mxu0 %v1094
        %1138 = vmatpush.bf16.msra.mxu0 %v1092
        %1139 = vmatpush.bf16.msra.mxu0 %v1090
        %1140 = vmatpush.bf16.msra.mxu0 %v1088
        %1141 = vmatmul.bf16.gmra.mxu0 %v720
        %v1142 = vpop.f32.mrf.mxu0
        %v1143 = vadd.f32 %v1036, %v1142
        %v1144 = vpop.f32.mrf.mxu0
        %v1145 = vadd.f32 %v1036, %v1144
        %1146 = vdwg.mxu0
        %v1147 = vmax.f32 %v1129, 0.0
        %v1148 = vmax.f32 %v1143, 0.0
        %v1149 = vmax.f32 %v1131, 0.0
        %v1150 = vmax.f32 %v1145, 0.0
        %v1151 = vmax.f32 %v1147, %v1149
        %v1152 = vrot.slane %v1151, 4
        %v1153 = vmax.f32 %v1151, %v1152
        %v1154 = vrot.slane %v1153, 2
        %v1155 = vmax.f32 %v1153, %v1154
        %v1156 = vrot.slane %v1155, 1
        %v1157 = vmax.f32 %v1155, %v1156
        %v1158 = vmax.f32 %v1148, %v1150
        %v1159 = vrot.slane %v1158, 4
        %v1160 = vmax.f32 %v1158, %v1159
        %v1161 = vrot.slane %v1160, 2
        %v1162 = vmax.f32 %v1160, %v1161
        %v1163 = vrot.slane %v1162, 1
        %v1164 = vmax.f32 %v1162, %v1163
        %v1165 = vld [vmem:[#allocation2 + $0x18] sm:$0xff]
        %v1166 = vld [vmem:[#allocation2 + $0x38] sm:$0xff]
        %v1167 = vld [vmem:[#allocation2 + $0x58] sm:$0xff]
        %v1168 = vld [vmem:[#allocation2 + $0x78] sm:$0xff]
        %v1169 = vld [vmem:[#allocation2 + $0x98] sm:$0xff]
        %v1170 = vld [vmem:[#allocation2 + $0xb8] sm:$0xff]
        %v1171 = vld [vmem:[#allocation2 + $0xd8] sm:$0xff]
        %v1172 = vld [vmem:[#allocation2 + $0xf8] sm:$0xff]
        %v1173 = vld [vmem:[#allocation2 + $0x118] sm:$0xff]
        %v1174 = vld [vmem:[#allocation2 + $0x138] sm:$0xff]
        %v1175 = vld [vmem:[#allocation2 + $0x158] sm:$0xff]
        %v1176 = vld [vmem:[#allocation2 + $0x178] sm:$0xff]
        %v1177 = vld [vmem:[#allocation2 + $0x198] sm:$0xff]
        %v1178 = vld [vmem:[#allocation2 + $0x1b8] sm:$0xff]
        %v1179 = vld [vmem:[#allocation2 + $0x1d8] sm:$0xff]
        %v1180 = vld [vmem:[#allocation2 + $0x1f8] sm:$0xff]
        %v1181 = vld [vmem:[%s10 + $0x6] sm:$0x3]
        %v1183 = vperm.slane %v1181, 0
        %v1184 = vperm.slane %v1181, 1
        %v1203 = vunpack.c.l.b16 %v1165
        %v1204 = vunpack.c.h.b16 %v1165
        %v1205 = vunpack.c.l.b16 %v1166
        %v1206 = vunpack.c.h.b16 %v1166
        %v1207 = vunpack.c.l.b16 %v1167
        %v1208 = vunpack.c.h.b16 %v1167
        %v1209 = vunpack.c.l.b16 %v1168
        %v1210 = vunpack.c.h.b16 %v1168
        %v1211 = vunpack.c.l.b16 %v1169
        %v1212 = vunpack.c.h.b16 %v1169
        %v1213 = vunpack.c.l.b16 %v1170
        %v1214 = vunpack.c.h.b16 %v1170
        %v1215 = vunpack.c.l.b16 %v1171
        %v1216 = vunpack.c.h.b16 %v1171
        %v1217 = vunpack.c.l.b16 %v1172
        %v1218 = vunpack.c.h.b16 %v1172
        %v1219 = vunpack.c.l.b16 %v1173
        %v1220 = vunpack.c.h.b16 %v1173
        %v1221 = vunpack.c.l.b16 %v1174
        %v1222 = vunpack.c.h.b16 %v1174
        %v1223 = vunpack.c.l.b16 %v1175
        %v1224 = vunpack.c.h.b16 %v1175
        %v1225 = vunpack.c.l.b16 %v1176
        %v1226 = vunpack.c.h.b16 %v1176
        %v1227 = vunpack.c.l.b16 %v1177
        %v1228 = vunpack.c.h.b16 %v1177
        %v1229 = vunpack.c.l.b16 %v1178
        %v1230 = vunpack.c.h.b16 %v1178
        %v1231 = vunpack.c.l.b16 %v1179
        %v1232 = vunpack.c.h.b16 %v1179
        %v1233 = vunpack.c.l.b16 %v1180
        %v1234 = vunpack.c.h.b16 %v1180
        %v1235 = vpack.c.b16 %v1205, %v1203
        %v1236 = vpack.c.b16 %v1206, %v1204
        %v1237 = vpack.c.b16 %v1209, %v1207
        %v1238 = vpack.c.b16 %v1210, %v1208
        %v1239 = vpack.c.b16 %v1213, %v1211
        %v1240 = vpack.c.b16 %v1214, %v1212
        %v1241 = vpack.c.b16 %v1217, %v1215
        %v1242 = vpack.c.b16 %v1218, %v1216
        %v1243 = vpack.c.b16 %v1221, %v1219
        %v1244 = vpack.c.b16 %v1222, %v1220
        %v1245 = vpack.c.b16 %v1225, %v1223
        %v1246 = vpack.c.b16 %v1226, %v1224
        %v1247 = vpack.c.b16 %v1229, %v1227
        %v1248 = vpack.c.b16 %v1230, %v1228
        %v1249 = vpack.c.b16 %v1233, %v1231
        %v1250 = vpack.c.b16 %v1234, %v1232
        %1267 = vmatpush.bf16.msra.mxu0 %v1249
        %1268 = vmatpush.bf16.msra.mxu0 %v1247
        %1269 = vmatpush.bf16.msra.mxu0 %v1245
        %1270 = vmatpush.bf16.msra.mxu0 %v1243
        %1271 = vmatpush.bf16.msra.mxu0 %v1241
        %1272 = vmatpush.bf16.msra.mxu0 %v1239
        %1273 = vmatpush.bf16.msra.mxu0 %v1237
        %1274 = vmatpush.bf16.msra.mxu0 %v1235
        %1275 = vmatmul.bf16.gmra.mxu0 %v720
        %v1276 = vpop.f32.mrf.mxu0
        %v1277 = vadd.f32 %v1183, %v1276
        %v1278 = vpop.f32.mrf.mxu0
        %v1279 = vadd.f32 %v1183, %v1278
        %1280 = vdwg.mxu0
        %1281 = vmatpush.bf16.msra.mxu0 %v1250
        %1282 = vmatpush.bf16.msra.mxu0 %v1248
        %1283 = vmatpush.bf16.msra.mxu0 %v1246
        %1284 = vmatpush.bf16.msra.mxu0 %v1244
        %1285 = vmatpush.bf16.msra.mxu0 %v1242
        %1286 = vmatpush.bf16.msra.mxu0 %v1240
        %1287 = vmatpush.bf16.msra.mxu0 %v1238
        %1288 = vmatpush.bf16.msra.mxu0 %v1236
        %1289 = vmatmul.bf16.gmra.mxu0 %v720
        %v1290 = vpop.f32.mrf.mxu0
        %v1291 = vadd.f32 %v1184, %v1290
        %v1292 = vpop.f32.mrf.mxu0
        %v1293 = vadd.f32 %v1184, %v1292
        %1294 = vdwg.mxu0
        %v1295 = vmax.f32 %v1277, 0.0
        %v1296 = vmax.f32 %v1291, 0.0
        %v1297 = vmax.f32 %v1279, 0.0
        %v1298 = vmax.f32 %v1293, 0.0
        %v1299 = vmax.f32 %v1295, %v1297
        %v1300 = vrot.slane %v1299, 4
        %v1301 = vmax.f32 %v1299, %v1300
        %v1302 = vrot.slane %v1301, 2
        %v1303 = vmax.f32 %v1301, %v1302
        %v1304 = vrot.slane %v1303, 1
        %v1305 = vmax.f32 %v1303, %v1304
        %v1306 = vmax.f32 %v1296, %v1298
        %v1307 = vrot.slane %v1306, 4
        %v1308 = vmax.f32 %v1306, %v1307
        %v1309 = vrot.slane %v1308, 2
        %v1310 = vmax.f32 %v1308, %v1309
        %v1311 = vrot.slane %v1310, 1
        %v1312 = vmax.f32 %v1310, %v1311
        %v1313 = vld [vmem:[%s459] sm:$0xff]
        %v1322 = vrot.slane %v868, 7
        %v1323 = vrot.slane %v1009, 6
        %v1324 = vrot.slane %v1016, 5
        %v1325 = vrot.slane %v1157, 4
        %v1326 = vrot.slane %v1164, 3
        %v1327 = vrot.slane %v1305, 2
        %v1328 = vrot.slane %v1312, 1
        %vm1329 = vcmask 1040384
        %v1330 = vsel %vm1329, %v861, %v1322
        %vm1331 = vcmask 1042434
        %v1332 = vsel %vm1331, %v1323, %v1324
        %vm1333 = vcmask 1041408
        %v1334 = vsel %vm1333, %v1330, %v1332
        %vm1335 = vcmask 1044484
        %v1336 = vsel %vm1335, %v1325, %v1326
        %vm1337 = vcmask 1046534
        %v1338 = vsel %vm1337, %v1327, %v1328
        %vm1339 = vcmask 1045508
        %v1340 = vsel %vm1339, %v1336, %v1338
        %v1341 = vsel %vm493, %v1334, %v1340
        %v1343 = vmax.f32 %v1313, %v1341
        %1344 = vst [vmem:[%s459] sm:$0xff] %v1343
        %s1345 = sand.u32 %s291, 1
        %s1346 = scalar_lea.sflag [#allocation4], %s1345
        %s1347 = sand.u32 %s291, 1
        %s1348 = smul.addr %s1347, 8
        %s1349 = scalar_lea.vmem [#allocation5], %s1348
        %s1350 = sand.u32 %s317, 1
        %s1351 = scalar_lea.sflag [#allocation7], %s1350
        %s1352 = sand.u32 %s317, 1
        %s1353 = smul.addr %s1352, 8
        %s1354 = scalar_lea.vmem [#allocation6], %s1353
        // Predicated region
        $region73: #{tpu_custom_call.1} parent=63 // pred_check
          %p1355 = pneg %p301
        $region74: #{tpu_custom_call.1} parent=63 // pred_check_branch
          %1357 = sbr.rel (%p1355) target = $region76
        $region75: #{tpu_custom_call.1} parent=63 // pred_region
          %s1358 = smul.u32 2, %s36
          %1360 = vsyncadd %s1346, 0
          %s1361 = smul.addr %s35, 2
          %s1362 = sadd.s32 %s1358, %s1361
          %s1363 = smul.addr %s1362, 4
          %s1364 = scalar_lea.hbm %s11, %s1363
          %s1365 = sshll.u32 %s1349, 4
          %s1366 = int_to_ptr.vmem [resolvable:$true] %s1365
          %s1367 = sshll.u32 %s1364, 4
          %s1368 = int_to_ptr.hbm [resolvable:$true] %s1367
          %1373 = dma.vmem_to_hbm [thread:$0]  %s1366, 128, %s1368, %s1346, 64, 64, 4
        $region76: #{tpu_custom_call.1} parent=63 // pred_fallthru
          _
        // Predicated region
        $region77: #{tpu_custom_call.1} parent=63 // pred_check
          %p1374 = pneg %p327
        $region78: #{tpu_custom_call.1} parent=63 // pred_check_branch
          %1376 = sbr.rel (%p1374) target = $region80
        $region79: #{tpu_custom_call.1} parent=63 // pred_region
          %1378 = vsyncadd %s1351, 0
          %s1379 = smul.addr %s35, 8
          %s1380 = scalar_lea.hbm %s12, %s1379
          %s1382 = sshll.u32 %s1354, 4
          %s1383 = int_to_ptr.vmem [resolvable:$true] %s1382
          %s1384 = sshll.u32 %s1380, 4
          %s1385 = int_to_ptr.hbm [resolvable:$true] %s1384
          %1387 = dma.vmem_to_hbm [thread:$0]  %s1383, 128, %s1385, %s1351
        $region80: #{tpu_custom_call.1} parent=63 // pred_fallthru
          _
      $region64: #{tpu_custom_call.1} parent=5 // pred_fallthru
        _
      %p1388 = scmp.le.s32.totalorder 2, %s26
      // Predicated region
      $region81: #{tpu_custom_call.1} parent=5 // pred_check
        %p1389 = pneg %p1388
      $region82: #{tpu_custom_call.1} parent=5 // pred_check_branch
        %1391 = sbr.rel (%p1389) target = $region84
      $region83: #{tpu_custom_call.1} parent=5 // pred_region
        %s1392 = ssub.s32 %s26, 2
        // Predicated region
        $region85: #{tpu_custom_call.1} parent=83 // pred_check
          %p1393 = pneg %p307
        $region86: #{tpu_custom_call.1} parent=83 // pred_check_branch
          %1395 = sbr.rel (%p1393) target = $region88
        $region87: #{tpu_custom_call.1} parent=83 // pred_region
          %s1396 = sand.u32 %s292, 1
          %s1397 = scalar_lea.sflag [#allocation4], %s1396
          %s1398 = sand.u32 %s292, 1
          %s1399 = smul.addr %s1398, 8
          %s1400 = scalar_lea.vmem [#allocation5], %s1399
          %1402 = dma.done %s1397, 128
        $region88: #{tpu_custom_call.1} parent=83 // pred_fallthru
          _
        // Predicated region
        $region89: #{tpu_custom_call.1} parent=83 // pred_check
          %p1403 = pneg %p333
        $region90: #{tpu_custom_call.1} parent=83 // pred_check_branch
          %1405 = sbr.rel (%p1403) target = $region92
        $region91: #{tpu_custom_call.1} parent=83 // pred_region
          %s1406 = sand.u32 %s318, 1
          %s1407 = scalar_lea.sflag [#allocation7], %s1406
          %s1408 = sand.u32 %s318, 1
          %s1409 = smul.addr %s1408, 8
          %s1410 = scalar_lea.vmem [#allocation6], %s1409
          %1412 = dma.done %s1407, 128
        $region92: #{tpu_custom_call.1} parent=83 // pred_fallthru
          _
      $region84: #{tpu_custom_call.1} parent=5 // pred_fallthru
        _
    $region6: #{tpu_custom_call.1} parent=1 // loop_footer
      %s30 = sadd.s32 1, %s26
    $region7: #{tpu_custom_call.1} parent=1 // loop_footer_branch
      %25 = sbr.rel target = $region3
    $region8: #{tpu_custom_call.1} parent=1 // loop_exit
      _
    %1413 = vsyncpa [#allocation3], 1
    %s1414 = scalar_lea.sflag [#allocation3], 1
    %1415 = vsyncpa %s1414, 1
    %1416 = vsyncpa [#allocation4], 1
    %s1417 = scalar_lea.sflag [#allocation4], 1
    %1418 = vsyncpa %s1417, 1
    %1419 = vsyncpa [#allocation7], 1
    %s1420 = scalar_lea.sflag [#allocation7], 1
    %1421 = vsyncpa %s1420, 1

</llo_original>
